<compile_context>
chip_gen: v7x
topology: tpu7x:2x2x1
jax: 0.10.0
libtpu: 0.0.40
codegen_flags: <defaults>
</compile_context>

<pallas_src>
import functools

import jax
import jax.numpy as jnp
from jax.experimental import pallas as pl
from jax.experimental.pallas import tpu as pltpu


# ------------------------------ Pallas kernel --------------------------------

def lenet_kernel(x_ref,                                   # (TB*32+8, 32) image rows
                 m1_ref, b1_ref, s1we_ref, s1wo_ref,      # conv1 + width-pool1
                 m2_ref, b2_ref, s2we_ref, s2wo_ref,      # conv2 + width-pool2
                 wf1_ref, bf1_ref, wf2_ref, bf2_ref, wf3_ref, bf3_ref,  # FC stack
                 out_ref,                                 # (TB, 128) padded logits
                 a1s_ref, a2s_ref,                        # VMEM scratch
                 *, tb):
    f32 = jnp.float32
    dot = functools.partial(jnp.dot, preferred_element_type=jnp.float32)
    R1 = tb * 16   # pooled-row pairs per step after conv1 (rows 14..15/img = garbage)
    R2 = tb * 8    # pooled-row pairs per step after conv2 (rows  5..7 /img = garbage)

    # ---- conv1 (1->6, k=5) + tanh + 2x2 max-pool -----------------------------
    # X row (b*16+q), lane t*32+w  holds  x[b, 2q+t(+1), w]  -> even/odd conv rows.
    x1e = jnp.concatenate(
        [x_ref[pl.ds(t, R1, stride=2), :] for t in range(5)], axis=1)      # (R1,160)
    x1o = jnp.concatenate(
        [x_ref[pl.ds(t + 1, R1, stride=2), :] for t in range(5)], axis=1)
    z1e = jnp.tanh(dot(x1e, m1_ref[...]) + b1_ref[...])                    # (R1,168)
    z1o = jnp.tanh(dot(x1o, m1_ref[...]) + b1_ref[...])
    r1 = jnp.maximum(z1e, z1o)                                             # height pool
    a1 = jnp.maximum(dot(r1, s1we_ref[...]), dot(r1, s1wo_ref[...]))       # (R1, 84)

    # Stash pooled activations so conv2 can read strided row windows from them.
    a1s_ref[:R1, :] = a1
    a1s_ref[R1:, :] = jnp.zeros((8, 84), f32)     # tail rows read only by garbage rows

    # ---- conv2 (6->16, k=5) + tanh + 2x2 max-pool ----------------------------
    x2e = jnp.concatenate(
        [a1s_ref[pl.ds(t, R2, stride=2), :] for t in range(5)], axis=1)    # (R2,420)
    x2o = jnp.concatenate(
        [a1s_ref[pl.ds(t + 1, R2, stride=2), :] for t in range(5)], axis=1)
    z2e = jnp.tanh(dot(x2e, m2_ref[...]) + b2_ref[...])                    # (R2,160)
    z2o = jnp.tanh(dot(x2o, m2_ref[...]) + b2_ref[...])
    r2 = jnp.maximum(z2e, z2o)                                             # height pool
    a2 = jnp.maximum(dot(r2, s2we_ref[...]), dot(r2, s2wo_ref[...]))       # (R2, 80)
    a2s_ref[...] = a2

    # ---- FC stack: flatten via stride-8 row gather, then 3 dense matmuls -----
    a2f = jnp.concatenate(
        [a2s_ref[pl.ds(m, tb, stride=8), :] for m in range(5)], axis=1)    # (TB,400)
    h1 = jnp.maximum(dot(a2f, wf1_ref[...]) + bf1_ref[...], 0.0)           # (TB,128)
    h2 = jnp.maximum(dot(h1, wf2_ref[...]) + bf2_ref[...], 0.0)            # (TB,128)
    out_ref[...] = dot(h2, wf3_ref[...]) + bf3_ref[...]                    # (TB,128)


# --------------------------- One-time weight packing --------------------------

def pack_params(p, num_classes):
    """Repack PyTorch-layout params into kernel-friendly VMEM layouts (once)."""
    f32 = jnp.float32
    K = 5

    # conv1 -> folded 5-tap band matrix: M1[t*32 + w, o*28 + j] = w1[o,0,t,w-j].
    w1 = p["conv1_w"].astype(f32)                                   # (6,1,5,5)
    wj = jnp.arange(32)[:, None] - jnp.arange(28)[None, :]          # w - j
    v1 = (wj >= 0) & (wj < K)
    wj1 = jnp.clip(wj, 0, K - 1)
    M1 = jnp.concatenate([
        jnp.concatenate([jnp.where(v1, w1[o, 0, t, wj1], 0.0)
                         for o in range(6)], axis=1)                # (32, 168)
        for t in range(K)], axis=0)                                 # (160, 168)
    B1 = jnp.repeat(p["conv1_b"].astype(f32), 28)[None, :]          # (1, 168)

    # width-pool1 selection matrices (lane o*28+2jj(+1) -> lane o*14+jj).
    q1 = jnp.arange(84)
    t1 = (q1 // 14) * 28 + 2 * (q1 % 14)
    S1WE = (jnp.arange(168)[:, None] == t1[None, :]).astype(f32)    # (168, 84)
    S1WO = (jnp.arange(168)[:, None] == t1[None, :] + 1).astype(f32)

    # conv2 -> folded band matrix: M2[t*84 + c*14 + w, o*10 + j] = w2[o,c,t,w-j].
    w2 = p["conv2_w"].astype(f32)                                   # (16,6,5,5)
    wj = jnp.arange(14)[:, None] - jnp.arange(10)[None, :]
    v2 = (wj >= 0) & (wj < K)
    wj2 = jnp.clip(wj, 0, K - 1)
    M2 = jnp.concatenate([
        jnp.concatenate([
            jnp.concatenate([jnp.where(v2, w2[o, c, t, wj2], 0.0)
                             for o in range(16)], axis=1)           # (14, 160)
            for c in range(6)], axis=0)                             # (84, 160)
        for t in range(K)], axis=0)                                 # (420, 160)
    B2 = jnp.repeat(p["conv2_b"].astype(f32), 10)[None, :]          # (1, 160)

    # width-pool2 selection matrices (lane o*10+2jj(+1) -> lane o*5+jj).
    q2 = jnp.arange(80)
    t2 = (q2 // 5) * 10 + 2 * (q2 % 5)
    S2WE = (jnp.arange(160)[:, None] == t2[None, :]).astype(f32)    # (160, 80)
    S2WO = (jnp.arange(160)[:, None] == t2[None, :] + 1).astype(f32)

    # fc1: kernel flat index is m*80 + o*5 + jj, PyTorch flat is o*25 + m*5 + jj.
    wf1 = p["fc1_w"].astype(f32).reshape(120, 16, 5, 5)             # [n, o, m, jj]
    wf1 = wf1.transpose(2, 1, 3, 0).reshape(400, 120)               # [m*80+o*5+jj, n]
    WF1 = jnp.pad(wf1, ((0, 0), (0, 8)))                            # (400, 128)
    BF1 = jnp.pad(p["fc1_b"].astype(f32), (0, 8))[None, :]          # (1, 128)

    WF2 = jnp.pad(p["fc2_w"].astype(f32).T, ((0, 8), (0, 44)))      # (128, 128)
    BF2 = jnp.pad(p["fc2_b"].astype(f32), (0, 44))[None, :]         # (1, 128)

    WF3 = jnp.pad(p["fc3_w"].astype(f32).T,
                  ((0, 44), (0, 128 - num_classes)))                # (128, 128)
    BF3 = jnp.pad(p["fc3_b"].astype(f32), (0, 128 - num_classes))[None, :]

    return (M1, B1, S1WE, S1WO, M2, B2, S2WE, S2WO,
            WF1, BF1, WF2, BF2, WF3, BF3)


# ------------------------------- Forward wrapper ------------------------------

def lenet_forward(x, packed, num_classes, *, block_b=128):
    B = x.shape[0]
    TB = int(min(block_b, B))           # images per grid step
    G = -(-B // TB)                     # cdiv
    Bp = G * TB

    xr = x.reshape(B, 32, 32).astype(jnp.float32)
    if Bp != B:
        xr = jnp.pad(xr, ((0, Bp - B), (0, 0), (0, 0)))
    # (G, TB*32 + 8, 32): per-tile stacked image rows + 8 zero tail rows so the
    # in-kernel 5-tap row windows of the last image in a tile stay in bounds.
    xt = jnp.pad(xr.reshape(G, TB * 32, 32), ((0, 0), (0, 8), (0, 0)))

    in_specs = [pl.BlockSpec((None, TB * 32 + 8, 32), lambda g: (g, 0, 0))]
    in_specs += [pl.BlockSpec(w.shape, lambda g: (0, 0)) for w in packed]

    out = pl.pallas_call(
        functools.partial(lenet_kernel, tb=TB),
        out_shape=jax.ShapeDtypeStruct((Bp, 128), jnp.float32),
        grid=(G,),
        in_specs=in_specs,
        out_specs=pl.BlockSpec((TB, 128), lambda g: (g, 0)),
        scratch_shapes=[pltpu.VMEM((TB * 16 + 8, 84), jnp.float32),
                        pltpu.VMEM((TB * 8, 80), jnp.float32)],
        compiler_params=pltpu.CompilerParams(
            dimension_semantics=("parallel",),
            vmem_limit_bytes=64 * 1024 * 1024),
    )(xt, *packed)
    return out[:B, :num_classes]


# --------------------------- Params & pure-JAX reference ----------------------

def init_params(key, num_classes=10):
    ks = jax.random.split(key, 10)

    def u(k, shape, fan_in):
        bound = 1.0 / jnp.sqrt(fan_in)
        return jax.random.uniform(k, shape, jnp.float32, -bound, bound)

    return {
        "conv1_w": u(ks[0], (6, 1, 5, 5), 1 * 5 * 5),
        "conv1_b": u(ks[1], (6,), 1 * 5 * 5),
        "conv2_w": u(ks[2], (16, 6, 5, 5), 6 * 5 * 5),
        "conv2_b": u(ks[3], (16,), 6 * 5 * 5),
        "fc1_w":   u(ks[4], (120, 400), 400),
        "fc1_b":   u(ks[5], (120,), 400),
        "fc2_w":   u(ks[6], (84, 120), 120),
        "fc2_b":   u(ks[7], (84,), 120),
        "fc3_w":   u(ks[8], (num_classes, 84), 84),
        "fc3_b":   u(ks[9], (num_classes,), 84),
    }


def lenet_reference(x, p):
    hp = jax.lax.Precision.HIGHEST

    def conv(x, w, b):
        y = jax.lax.conv_general_dilated(
            x, w, (1, 1), "VALID",
            dimension_numbers=("NCHW", "OIHW", "NCHW"), precision=hp)
        return jnp.tanh(y + b[None, :, None, None])

    def pool(x):
        B, C, H, W = x.shape
        return x.reshape(B, C, H // 2, 2, W // 2, 2).max(axis=(3, 5))

    x = pool(conv(x, p["conv1_w"], p["conv1_b"]))
    x = pool(conv(x, p["conv2_w"], p["conv2_b"]))
    x = x.reshape(x.shape[0], -1)
    x = jnp.maximum(jnp.dot(x, p["fc1_w"].T, precision=hp) + p["fc1_b"], 0.0)
    x = jnp.maximum(jnp.dot(x, p["fc2_w"].T, precision=hp) + p["fc2_b"], 0.0)
    return jnp.dot(x, p["fc3_w"].T, precision=hp) + p["fc3_b"]


# ------------------------------------ Main ------------------------------------

if __name__ == "__main__":
    key = jax.random.PRNGKey(0)
    kx, kp = jax.random.split(key)

    num_classes = 10
    # Classic LeNet-5 geometry: fc stack expects 16*5*5 -> input is (B, 1, 32, 32).
    x = jax.random.normal(kx, (2, 1, 32, 32), jnp.float32)
    params = init_params(kp, num_classes)
    packed = pack_params(params, num_classes)   # one-time, outside the jit

    fwd = jax.jit(functools.partial(lenet_forward, num_classes=num_classes))
    out = jax.block_until_ready(fwd(x, packed))

    ref = lenet_reference(x, params)
    assert out.shape == (2, num_classes)
    err = float(jnp.max(jnp.abs(out - ref)))
    assert jnp.allclose(out, ref, atol=3e-3, rtol=3e-3), err

    print("KERNEL_OK")
</pallas_src>

<mosaic_0001>
module attributes {stable_mosaic.version = 11 : i64} {
  func.func @lenet_kernel(%arg0: i32, %arg1: memref<1x72x32xf32, #tpu.memory_space<vmem>>, %arg2: memref<160x168xf32, #tpu.memory_space<vmem>>, %arg3: memref<1x168xf32, #tpu.memory_space<vmem>>, %arg4: memref<168x84xf32, #tpu.memory_space<vmem>>, %arg5: memref<168x84xf32, #tpu.memory_space<vmem>>, %arg6: memref<420x160xf32, #tpu.memory_space<vmem>>, %arg7: memref<1x160xf32, #tpu.memory_space<vmem>>, %arg8: memref<160x80xf32, #tpu.memory_space<vmem>>, %arg9: memref<160x80xf32, #tpu.memory_space<vmem>>, %arg10: memref<400x128xf32, #tpu.memory_space<vmem>>, %arg11: memref<1x128xf32, #tpu.memory_space<vmem>>, %arg12: memref<128x128xf32, #tpu.memory_space<vmem>>, %arg13: memref<1x128xf32, #tpu.memory_space<vmem>>, %arg14: memref<128x128xf32, #tpu.memory_space<vmem>>, %arg15: memref<1x128xf32, #tpu.memory_space<vmem>>, %arg16: memref<2x128xf32, #tpu.memory_space<vmem>>, %arg17: memref<40x84xf32, #tpu.memory_space<vmem>>, %arg18: memref<16x80xf32, #tpu.memory_space<vmem>>) attributes {dimension_semantics = [#tpu.dimension_semantics<parallel>], iteration_bounds = array<i64: 1>, scalar_prefetch = 0 : i64, scratch_operands = 2 : i64, tpu.core_type = #tpu.core_type<tc>, window_params = [{transform_indices = @transform_0, window_bounds = array<i64: 1, 72, 32>}, {pipeline_mode = #tpu.pipeline_mode<synchronous>, transform_indices = @transform_1, window_bounds = array<i64: 160, 168>}, {pipeline_mode = #tpu.pipeline_mode<synchronous>, transform_indices = @transform_2, window_bounds = array<i64: 1, 168>}, {pipeline_mode = #tpu.pipeline_mode<synchronous>, transform_indices = @transform_3, window_bounds = array<i64: 168, 84>}, {pipeline_mode = #tpu.pipeline_mode<synchronous>, transform_indices = @transform_4, window_bounds = array<i64: 168, 84>}, {pipeline_mode = #tpu.pipeline_mode<synchronous>, transform_indices = @transform_5, window_bounds = array<i64: 420, 160>}, {pipeline_mode = #tpu.pipeline_mode<synchronous>, transform_indices = @transform_6, window_bounds = array<i64: 1, 160>}, {pipeline_mode = #tpu.pipeline_mode<synchronous>, transform_indices = @transform_7, window_bounds = array<i64: 160, 80>}, {pipeline_mode = #tpu.pipeline_mode<synchronous>, transform_indices = @transform_8, window_bounds = array<i64: 160, 80>}, {pipeline_mode = #tpu.pipeline_mode<synchronous>, transform_indices = @transform_9, window_bounds = array<i64: 400, 128>}, {pipeline_mode = #tpu.pipeline_mode<synchronous>, transform_indices = @transform_10, window_bounds = array<i64: 1, 128>}, {pipeline_mode = #tpu.pipeline_mode<synchronous>, transform_indices = @transform_11, window_bounds = array<i64: 128, 128>}, {pipeline_mode = #tpu.pipeline_mode<synchronous>, transform_indices = @transform_12, window_bounds = array<i64: 1, 128>}, {pipeline_mode = #tpu.pipeline_mode<synchronous>, transform_indices = @transform_13, window_bounds = array<i64: 128, 128>}, {pipeline_mode = #tpu.pipeline_mode<synchronous>, transform_indices = @transform_14, window_bounds = array<i64: 1, 128>}, {transform_indices = @transform_15, window_bounds = array<i64: 2, 128>}]} {
    %c0 = arith.constant 0 : index
    %c0_0 = arith.constant 0 : index
    %c0_1 = arith.constant 0 : index
    %0 = tpu.strided_load %arg1[%c0, %c0_0, %c0_1] {strides = array<i32: 1, 2, 1>} : memref<1x72x32xf32, #tpu.memory_space<vmem>>, vector<1x32x32xf32>
    %1 = vector.shape_cast %0 : vector<1x32x32xf32> to vector<32x32xf32>
    %c0_2 = arith.constant 0 : index
    %c1 = arith.constant 1 : index
    %c0_3 = arith.constant 0 : index
    %2 = tpu.strided_load %arg1[%c0_2, %c1, %c0_3] {strides = array<i32: 1, 2, 1>} : memref<1x72x32xf32, #tpu.memory_space<vmem>>, vector<1x32x32xf32>
    %3 = vector.shape_cast %2 : vector<1x32x32xf32> to vector<32x32xf32>
    %c0_4 = arith.constant 0 : index
    %c2 = arith.constant 2 : index
    %c0_5 = arith.constant 0 : index
    %4 = tpu.strided_load %arg1[%c0_4, %c2, %c0_5] {strides = array<i32: 1, 2, 1>} : memref<1x72x32xf32, #tpu.memory_space<vmem>>, vector<1x32x32xf32>
    %5 = vector.shape_cast %4 : vector<1x32x32xf32> to vector<32x32xf32>
    %c0_6 = arith.constant 0 : index
    %c3 = arith.constant 3 : index
    %c0_7 = arith.constant 0 : index
    %6 = tpu.strided_load %arg1[%c0_6, %c3, %c0_7] {strides = array<i32: 1, 2, 1>} : memref<1x72x32xf32, #tpu.memory_space<vmem>>, vector<1x32x32xf32>
    %7 = vector.shape_cast %6 : vector<1x32x32xf32> to vector<32x32xf32>
    %c0_8 = arith.constant 0 : index
    %c4 = arith.constant 4 : index
    %c0_9 = arith.constant 0 : index
    %8 = tpu.strided_load %arg1[%c0_8, %c4, %c0_9] {strides = array<i32: 1, 2, 1>} : memref<1x72x32xf32, #tpu.memory_space<vmem>>, vector<1x32x32xf32>
    %9 = vector.shape_cast %8 : vector<1x32x32xf32> to vector<32x32xf32>
    %10 = tpu.concatenate %1, %3, %5, %7, %9 in 1 : vector<32x32xf32>, vector<32x32xf32>, vector<32x32xf32>, vector<32x32xf32>, vector<32x32xf32> -> vector<32x160xf32>
    %c0_10 = arith.constant 0 : index
    %c1_11 = arith.constant 1 : index
    %c0_12 = arith.constant 0 : index
    %11 = tpu.strided_load %arg1[%c0_10, %c1_11, %c0_12] {strides = array<i32: 1, 2, 1>} : memref<1x72x32xf32, #tpu.memory_space<vmem>>, vector<1x32x32xf32>
    %12 = vector.shape_cast %11 : vector<1x32x32xf32> to vector<32x32xf32>
    %c0_13 = arith.constant 0 : index
    %c2_14 = arith.constant 2 : index
    %c0_15 = arith.constant 0 : index
    %13 = tpu.strided_load %arg1[%c0_13, %c2_14, %c0_15] {strides = array<i32: 1, 2, 1>} : memref<1x72x32xf32, #tpu.memory_space<vmem>>, vector<1x32x32xf32>
    %14 = vector.shape_cast %13 : vector<1x32x32xf32> to vector<32x32xf32>
    %c0_16 = arith.constant 0 : index
    %c3_17 = arith.constant 3 : index
    %c0_18 = arith.constant 0 : index
    %15 = tpu.strided_load %arg1[%c0_16, %c3_17, %c0_18] {strides = array<i32: 1, 2, 1>} : memref<1x72x32xf32, #tpu.memory_space<vmem>>, vector<1x32x32xf32>
    %16 = vector.shape_cast %15 : vector<1x32x32xf32> to vector<32x32xf32>
    %c0_19 = arith.constant 0 : index
    %c4_20 = arith.constant 4 : index
    %c0_21 = arith.constant 0 : index
    %17 = tpu.strided_load %arg1[%c0_19, %c4_20, %c0_21] {strides = array<i32: 1, 2, 1>} : memref<1x72x32xf32, #tpu.memory_space<vmem>>, vector<1x32x32xf32>
    %18 = vector.shape_cast %17 : vector<1x32x32xf32> to vector<32x32xf32>
    %c0_22 = arith.constant 0 : index
    %c5 = arith.constant 5 : index
    %c0_23 = arith.constant 0 : index
    %19 = tpu.strided_load %arg1[%c0_22, %c5, %c0_23] {strides = array<i32: 1, 2, 1>} : memref<1x72x32xf32, #tpu.memory_space<vmem>>, vector<1x32x32xf32>
    %20 = vector.shape_cast %19 : vector<1x32x32xf32> to vector<32x32xf32>
    %21 = tpu.concatenate %12, %14, %16, %18, %20 in 1 : vector<32x32xf32>, vector<32x32xf32>, vector<32x32xf32>, vector<32x32xf32>, vector<32x32xf32> -> vector<32x160xf32>
    %c0_24 = arith.constant 0 : index
    %c0_25 = arith.constant 0 : index
    %22 = vector.load %arg2[%c0_24, %c0_25] : memref<160x168xf32, #tpu.memory_space<vmem>>, vector<160x168xf32>
    %cst = arith.constant dense<0.000000e+00> : vector<32x168xf32>
    %23 = tpu.matmul %10, %22, %cst {dimension_numbers = #tpu.dot_dimension_numbers<[1], [0], [0], [1], [0, 0, 1, 1], [], []>} : vector<32x160xf32>, vector<160x168xf32>, vector<32x168xf32> -> vector<32x168xf32>
    %c0_26 = arith.constant 0 : index
    %c0_27 = arith.constant 0 : index
    %24 = vector.load %arg3[%c0_26, %c0_27] : memref<1x168xf32, #tpu.memory_space<vmem>>, vector<1x168xf32>
    %25 = vector.broadcast %24 : vector<1x168xf32> to vector<32x168xf32>
    %26 = arith.addf %23, %25 : vector<32x168xf32>
    %27 = math.tanh %26 : vector<32x168xf32>
    %c0_28 = arith.constant 0 : index
    %c0_29 = arith.constant 0 : index
    %28 = vector.load %arg2[%c0_28, %c0_29] : memref<160x168xf32, #tpu.memory_space<vmem>>, vector<160x168xf32>
    %cst_30 = arith.constant dense<0.000000e+00> : vector<32x168xf32>
    %29 = tpu.matmul %21, %28, %cst_30 {dimension_numbers = #tpu.dot_dimension_numbers<[1], [0], [0], [1], [0, 0, 1, 1], [], []>} : vector<32x160xf32>, vector<160x168xf32>, vector<32x168xf32> -> vector<32x168xf32>
    %c0_31 = arith.constant 0 : index
    %c0_32 = arith.constant 0 : index
    %30 = vector.load %arg3[%c0_31, %c0_32] : memref<1x168xf32, #tpu.memory_space<vmem>>, vector<1x168xf32>
    %31 = vector.broadcast %30 : vector<1x168xf32> to vector<32x168xf32>
    %32 = arith.addf %29, %31 : vector<32x168xf32>
    %33 = math.tanh %32 : vector<32x168xf32>
    %34 = arith.maximumf %27, %33 : vector<32x168xf32>
    %c0_33 = arith.constant 0 : index
    %c0_34 = arith.constant 0 : index
    %35 = vector.load %arg4[%c0_33, %c0_34] : memref<168x84xf32, #tpu.memory_space<vmem>>, vector<168x84xf32>
    %cst_35 = arith.constant dense<0.000000e+00> : vector<32x84xf32>
    %36 = tpu.matmul %34, %35, %cst_35 {dimension_numbers = #tpu.dot_dimension_numbers<[1], [0], [0], [1], [0, 0, 1, 1], [], []>} : vector<32x168xf32>, vector<168x84xf32>, vector<32x84xf32> -> vector<32x84xf32>
    %c0_36 = arith.constant 0 : index
    %c0_37 = arith.constant 0 : index
    %37 = vector.load %arg5[%c0_36, %c0_37] : memref<168x84xf32, #tpu.memory_space<vmem>>, vector<168x84xf32>
    %cst_38 = arith.constant dense<0.000000e+00> : vector<32x84xf32>
    %38 = tpu.matmul %34, %37, %cst_38 {dimension_numbers = #tpu.dot_dimension_numbers<[1], [0], [0], [1], [0, 0, 1, 1], [], []>} : vector<32x168xf32>, vector<168x84xf32>, vector<32x84xf32> -> vector<32x84xf32>
    %39 = arith.maximumf %36, %38 : vector<32x84xf32>
    %c0_39 = arith.constant 0 : index
    %c0_40 = arith.constant 0 : index
    %40 = vector.load %arg17[%c0_39, %c0_40] : memref<40x84xf32, #tpu.memory_space<vmem>>, vector<32x84xf32>
    tpu.vector_store %arg17[%c0_39, %c0_40], %39 {strides = array<i32>} : memref<40x84xf32, #tpu.memory_space<vmem>>, vector<32x84xf32>,
    %cst_41 = arith.constant 0.000000e+00 : f32
    %41 = vector.broadcast %cst_41 : f32 to vector<8x84xf32>
    %c32 = arith.constant 32 : index
    %c0_42 = arith.constant 0 : index
    %42 = vector.load %arg17[%c32, %c0_42] : memref<40x84xf32, #tpu.memory_space<vmem>>, vector<8x84xf32>
    tpu.vector_store %arg17[%c32, %c0_42], %41 {strides = array<i32>} : memref<40x84xf32, #tpu.memory_space<vmem>>, vector<8x84xf32>,
    %c0_43 = arith.constant 0 : index
    %c0_44 = arith.constant 0 : index
    %43 = tpu.strided_load %arg17[%c0_43, %c0_44] {strides = array<i32: 2, 1>} : memref<40x84xf32, #tpu.memory_space<vmem>>, vector<16x84xf32>
    %c1_45 = arith.constant 1 : index
    %c0_46 = arith.constant 0 : index
    %44 = tpu.strided_load %arg17[%c1_45, %c0_46] {strides = array<i32: 2, 1>} : memref<40x84xf32, #tpu.memory_space<vmem>>, vector<16x84xf32>
    %c2_47 = arith.constant 2 : index
    %c0_48 = arith.constant 0 : index
    %45 = tpu.strided_load %arg17[%c2_47, %c0_48] {strides = array<i32: 2, 1>} : memref<40x84xf32, #tpu.memory_space<vmem>>, vector<16x84xf32>
    %c3_49 = arith.constant 3 : index
    %c0_50 = arith.constant 0 : index
    %46 = tpu.strided_load %arg17[%c3_49, %c0_50] {strides = array<i32: 2, 1>} : memref<40x84xf32, #tpu.memory_space<vmem>>, vector<16x84xf32>
    %c4_51 = arith.constant 4 : index
    %c0_52 = arith.constant 0 : index
    %47 = tpu.strided_load %arg17[%c4_51, %c0_52] {strides = array<i32: 2, 1>} : memref<40x84xf32, #tpu.memory_space<vmem>>, vector<16x84xf32>
    %48 = tpu.concatenate %43, %44, %45, %46, %47 in 1 : vector<16x84xf32>, vector<16x84xf32>, vector<16x84xf32>, vector<16x84xf32>, vector<16x84xf32> -> vector<16x420xf32>
    %c1_53 = arith.constant 1 : index
    %c0_54 = arith.constant 0 : index
    %49 = tpu.strided_load %arg17[%c1_53, %c0_54] {strides = array<i32: 2, 1>} : memref<40x84xf32, #tpu.memory_space<vmem>>, vector<16x84xf32>
    %c2_55 = arith.constant 2 : index
    %c0_56 = arith.constant 0 : index
    %50 = tpu.strided_load %arg17[%c2_55, %c0_56] {strides = array<i32: 2, 1>} : memref<40x84xf32, #tpu.memory_space<vmem>>, vector<16x84xf32>
    %c3_57 = arith.constant 3 : index
    %c0_58 = arith.constant 0 : index
    %51 = tpu.strided_load %arg17[%c3_57, %c0_58] {strides = array<i32: 2, 1>} : memref<40x84xf32, #tpu.memory_space<vmem>>, vector<16x84xf32>
    %c4_59 = arith.constant 4 : index
    %c0_60 = arith.constant 0 : index
    %52 = tpu.strided_load %arg17[%c4_59, %c0_60] {strides = array<i32: 2, 1>} : memref<40x84xf32, #tpu.memory_space<vmem>>, vector<16x84xf32>
    %c5_61 = arith.constant 5 : index
    %c0_62 = arith.constant 0 : index
    %53 = tpu.strided_load %arg17[%c5_61, %c0_62] {strides = array<i32: 2, 1>} : memref<40x84xf32, #tpu.memory_space<vmem>>, vector<16x84xf32>
    %54 = tpu.concatenate %49, %50, %51, %52, %53 in 1 : vector<16x84xf32>, vector<16x84xf32>, vector<16x84xf32>, vector<16x84xf32>, vector<16x84xf32> -> vector<16x420xf32>
    %c0_63 = arith.constant 0 : index
    %c0_64 = arith.constant 0 : index
    %55 = vector.load %arg6[%c0_63, %c0_64] : memref<420x160xf32, #tpu.memory_space<vmem>>, vector<420x160xf32>
    %cst_65 = arith.constant dense<0.000000e+00> : vector<16x160xf32>
    %56 = tpu.matmul %48, %55, %cst_65 {dimension_numbers = #tpu.dot_dimension_numbers<[1], [0], [0], [1], [0, 0, 1, 1], [], []>} : vector<16x420xf32>, vector<420x160xf32>, vector<16x160xf32> -> vector<16x160xf32>
    %c0_66 = arith.constant 0 : index
    %c0_67 = arith.constant 0 : index
    %57 = vector.load %arg7[%c0_66, %c0_67] : memref<1x160xf32, #tpu.memory_space<vmem>>, vector<1x160xf32>
    %58 = vector.broadcast %57 : vector<1x160xf32> to vector<16x160xf32>
    %59 = arith.addf %56, %58 : vector<16x160xf32>
    %60 = math.tanh %59 : vector<16x160xf32>
    %c0_68 = arith.constant 0 : index
    %c0_69 = arith.constant 0 : index
    %61 = vector.load %arg6[%c0_68, %c0_69] : memref<420x160xf32, #tpu.memory_space<vmem>>, vector<420x160xf32>
    %cst_70 = arith.constant dense<0.000000e+00> : vector<16x160xf32>
    %62 = tpu.matmul %54, %61, %cst_70 {dimension_numbers = #tpu.dot_dimension_numbers<[1], [0], [0], [1], [0, 0, 1, 1], [], []>} : vector<16x420xf32>, vector<420x160xf32>, vector<16x160xf32> -> vector<16x160xf32>
    %c0_71 = arith.constant 0 : index
    %c0_72 = arith.constant 0 : index
    %63 = vector.load %arg7[%c0_71, %c0_72] : memref<1x160xf32, #tpu.memory_space<vmem>>, vector<1x160xf32>
    %64 = vector.broadcast %63 : vector<1x160xf32> to vector<16x160xf32>
    %65 = arith.addf %62, %64 : vector<16x160xf32>
    %66 = math.tanh %65 : vector<16x160xf32>
    %67 = arith.maximumf %60, %66 : vector<16x160xf32>
    %c0_73 = arith.constant 0 : index
    %c0_74 = arith.constant 0 : index
    %68 = vector.load %arg8[%c0_73, %c0_74] : memref<160x80xf32, #tpu.memory_space<vmem>>, vector<160x80xf32>
    %cst_75 = arith.constant dense<0.000000e+00> : vector<16x80xf32>
    %69 = tpu.matmul %67, %68, %cst_75 {dimension_numbers = #tpu.dot_dimension_numbers<[1], [0], [0], [1], [0, 0, 1, 1], [], []>} : vector<16x160xf32>, vector<160x80xf32>, vector<16x80xf32> -> vector<16x80xf32>
    %c0_76 = arith.constant 0 : index
    %c0_77 = arith.constant 0 : index
    %70 = vector.load %arg9[%c0_76, %c0_77] : memref<160x80xf32, #tpu.memory_space<vmem>>, vector<160x80xf32>
    %cst_78 = arith.constant dense<0.000000e+00> : vector<16x80xf32>
    %71 = tpu.matmul %67, %70, %cst_78 {dimension_numbers = #tpu.dot_dimension_numbers<[1], [0], [0], [1], [0, 0, 1, 1], [], []>} : vector<16x160xf32>, vector<160x80xf32>, vector<16x80xf32> -> vector<16x80xf32>
    %72 = arith.maximumf %69, %71 : vector<16x80xf32>
    %c0_79 = arith.constant 0 : index
    %c0_80 = arith.constant 0 : index
    %73 = vector.load %arg18[%c0_79, %c0_80] : memref<16x80xf32, #tpu.memory_space<vmem>>, vector<16x80xf32>
    tpu.vector_store %arg18[%c0_79, %c0_80], %72 {strides = array<i32>} : memref<16x80xf32, #tpu.memory_space<vmem>>, vector<16x80xf32>,
    %c0_81 = arith.constant 0 : index
    %c0_82 = arith.constant 0 : index
    %74 = tpu.strided_load %arg18[%c0_81, %c0_82] {strides = array<i32: 8, 1>} : memref<16x80xf32, #tpu.memory_space<vmem>>, vector<2x80xf32>
    %c1_83 = arith.constant 1 : index
    %c0_84 = arith.constant 0 : index
    %75 = tpu.strided_load %arg18[%c1_83, %c0_84] {strides = array<i32: 8, 1>} : memref<16x80xf32, #tpu.memory_space<vmem>>, vector<2x80xf32>
    %c2_85 = arith.constant 2 : index
    %c0_86 = arith.constant 0 : index
    %76 = tpu.strided_load %arg18[%c2_85, %c0_86] {strides = array<i32: 8, 1>} : memref<16x80xf32, #tpu.memory_space<vmem>>, vector<2x80xf32>
    %c3_87 = arith.constant 3 : index
    %c0_88 = arith.constant 0 : index
    %77 = tpu.strided_load %arg18[%c3_87, %c0_88] {strides = array<i32: 8, 1>} : memref<16x80xf32, #tpu.memory_space<vmem>>, vector<2x80xf32>
    %c4_89 = arith.constant 4 : index
    %c0_90 = arith.constant 0 : index
    %78 = tpu.strided_load %arg18[%c4_89, %c0_90] {strides = array<i32: 8, 1>} : memref<16x80xf32, #tpu.memory_space<vmem>>, vector<2x80xf32>
    %79 = tpu.concatenate %74, %75, %76, %77, %78 in 1 : vector<2x80xf32>, vector<2x80xf32>, vector<2x80xf32>, vector<2x80xf32>, vector<2x80xf32> -> vector<2x400xf32>
    %c0_91 = arith.constant 0 : index
    %c0_92 = arith.constant 0 : index
    %80 = vector.load %arg10[%c0_91, %c0_92] : memref<400x128xf32, #tpu.memory_space<vmem>>, vector<400x128xf32>
    %cst_93 = arith.constant dense<0.000000e+00> : vector<2x128xf32>
    %81 = tpu.matmul %79, %80, %cst_93 {dimension_numbers = #tpu.dot_dimension_numbers<[1], [0], [0], [1], [0, 0, 1, 1], [], []>} : vector<2x400xf32>, vector<400x128xf32>, vector<2x128xf32> -> vector<2x128xf32>
    %c0_94 = arith.constant 0 : index
    %c0_95 = arith.constant 0 : index
    %82 = vector.load %arg11[%c0_94, %c0_95] : memref<1x128xf32, #tpu.memory_space<vmem>>, vector<1x128xf32>
    %83 = vector.broadcast %82 : vector<1x128xf32> to vector<2x128xf32>
    %84 = arith.addf %81, %83 : vector<2x128xf32>
    %cst_96 = arith.constant 0.000000e+00 : f32
    %85 = vector.broadcast %cst_96 : f32 to vector<2x128xf32>
    %86 = arith.maximumf %84, %85 : vector<2x128xf32>
    %c0_97 = arith.constant 0 : index
    %c0_98 = arith.constant 0 : index
    %87 = vector.load %arg12[%c0_97, %c0_98] : memref<128x128xf32, #tpu.memory_space<vmem>>, vector<128x128xf32>
    %cst_99 = arith.constant dense<0.000000e+00> : vector<2x128xf32>
    %88 = tpu.matmul %86, %87, %cst_99 {dimension_numbers = #tpu.dot_dimension_numbers<[1], [0], [0], [1], [0, 0, 1, 1], [], []>} : vector<2x128xf32>, vector<128x128xf32>, vector<2x128xf32> -> vector<2x128xf32>
    %c0_100 = arith.constant 0 : index
    %c0_101 = arith.constant 0 : index
    %89 = vector.load %arg13[%c0_100, %c0_101] : memref<1x128xf32, #tpu.memory_space<vmem>>, vector<1x128xf32>
    %90 = vector.broadcast %89 : vector<1x128xf32> to vector<2x128xf32>
    %91 = arith.addf %88, %90 : vector<2x128xf32>
    %cst_102 = arith.constant 0.000000e+00 : f32
    %92 = vector.broadcast %cst_102 : f32 to vector<2x128xf32>
    %93 = arith.maximumf %91, %92 : vector<2x128xf32>
    %c0_103 = arith.constant 0 : index
    %c0_104 = arith.constant 0 : index
    %94 = vector.load %arg14[%c0_103, %c0_104] : memref<128x128xf32, #tpu.memory_space<vmem>>, vector<128x128xf32>
    %cst_105 = arith.constant dense<0.000000e+00> : vector<2x128xf32>
    %95 = tpu.matmul %93, %94, %cst_105 {dimension_numbers = #tpu.dot_dimension_numbers<[1], [0], [0], [1], [0, 0, 1, 1], [], []>} : vector<2x128xf32>, vector<128x128xf32>, vector<2x128xf32> -> vector<2x128xf32>
    %c0_106 = arith.constant 0 : index
    %c0_107 = arith.constant 0 : index
    %96 = vector.load %arg15[%c0_106, %c0_107] : memref<1x128xf32, #tpu.memory_space<vmem>>, vector<1x128xf32>
    %97 = vector.broadcast %96 : vector<1x128xf32> to vector<2x128xf32>
    %98 = arith.addf %95, %97 : vector<2x128xf32>
    %c0_108 = arith.constant 0 : index
    %c0_109 = arith.constant 0 : index
    %99 = vector.load %arg16[%c0_108, %c0_109] : memref<2x128xf32, #tpu.memory_space<vmem>>, vector<2x128xf32>
    tpu.vector_store %arg16[%c0_108, %c0_109], %98 {strides = array<i32>} : memref<2x128xf32, #tpu.memory_space<vmem>>, vector<2x128xf32>,
    return
  }
  func.func @transform_0(%arg0: i32) -> (i32, i32, i32) {
    %c0_i32 = arith.constant 0 : i32
    %c0_i32_0 = arith.constant 0 : i32
    %c0_i32_1 = arith.constant 0 : i32
    return %arg0, %c0_i32, %c0_i32_0 : i32, i32, i32
  }
  func.func @transform_1(%arg0: i32) -> (i32, i32) {
    %c0_i32 = arith.constant 0 : i32
    %c0_i32_0 = arith.constant 0 : i32
    %c0_i32_1 = arith.constant 0 : i32
    return %c0_i32, %c0_i32_0 : i32, i32
  }
  func.func @transform_2(%arg0: i32) -> (i32, i32) {
    %c0_i32 = arith.constant 0 : i32
    %c0_i32_0 = arith.constant 0 : i32
    %c0_i32_1 = arith.constant 0 : i32
    return %c0_i32, %c0_i32_0 : i32, i32
  }
  func.func @transform_3(%arg0: i32) -> (i32, i32) {
    %c0_i32 = arith.constant 0 : i32
    %c0_i32_0 = arith.constant 0 : i32
    %c0_i32_1 = arith.constant 0 : i32
    return %c0_i32, %c0_i32_0 : i32, i32
  }
  func.func @transform_4(%arg0: i32) -> (i32, i32) {
    %c0_i32 = arith.constant 0 : i32
    %c0_i32_0 = arith.constant 0 : i32
    %c0_i32_1 = arith.constant 0 : i32
    return %c0_i32, %c0_i32_0 : i32, i32
  }
  func.func @transform_5(%arg0: i32) -> (i32, i32) {
    %c0_i32 = arith.constant 0 : i32
    %c0_i32_0 = arith.constant 0 : i32
    %c0_i32_1 = arith.constant 0 : i32
    return %c0_i32, %c0_i32_0 : i32, i32
  }
  func.func @transform_6(%arg0: i32) -> (i32, i32) {
    %c0_i32 = arith.constant 0 : i32
    %c0_i32_0 = arith.constant 0 : i32
    %c0_i32_1 = arith.constant 0 : i32
    return %c0_i32, %c0_i32_0 : i32, i32
  }
  func.func @transform_7(%arg0: i32) -> (i32, i32) {
    %c0_i32 = arith.constant 0 : i32
    %c0_i32_0 = arith.constant 0 : i32
    %c0_i32_1 = arith.constant 0 : i32
    return %c0_i32, %c0_i32_0 : i32, i32
  }
  func.func @transform_8(%arg0: i32) -> (i32, i32) {
    %c0_i32 = arith.constant 0 : i32
    %c0_i32_0 = arith.constant 0 : i32
    %c0_i32_1 = arith.constant 0 : i32
    return %c0_i32, %c0_i32_0 : i32, i32
  }
  func.func @transform_9(%arg0: i32) -> (i32, i32) {
    %c0_i32 = arith.constant 0 : i32
    %c0_i32_0 = arith.constant 0 : i32
    %c0_i32_1 = arith.constant 0 : i32
    return %c0_i32, %c0_i32_0 : i32, i32
  }
  func.func @transform_10(%arg0: i32) -> (i32, i32) {
    %c0_i32 = arith.constant 0 : i32
    %c0_i32_0 = arith.constant 0 : i32
    %c0_i32_1 = arith.constant 0 : i32
    return %c0_i32, %c0_i32_0 : i32, i32
  }
  func.func @transform_11(%arg0: i32) -> (i32, i32) {
    %c0_i32 = arith.constant 0 : i32
    %c0_i32_0 = arith.constant 0 : i32
    %c0_i32_1 = arith.constant 0 : i32
    return %c0_i32, %c0_i32_0 : i32, i32
  }
  func.func @transform_12(%arg0: i32) -> (i32, i32) {
    %c0_i32 = arith.constant 0 : i32
    %c0_i32_0 = arith.constant 0 : i32
    %c0_i32_1 = arith.constant 0 : i32
    return %c0_i32, %c0_i32_0 : i32, i32
  }
  func.func @transform_13(%arg0: i32) -> (i32, i32) {
    %c0_i32 = arith.constant 0 : i32
    %c0_i32_0 = arith.constant 0 : i32
    %c0_i32_1 = arith.constant 0 : i32
    return %c0_i32, %c0_i32_0 : i32, i32
  }
  func.func @transform_14(%arg0: i32) -> (i32, i32) {
    %c0_i32 = arith.constant 0 : i32
    %c0_i32_0 = arith.constant 0 : i32
    %c0_i32_1 = arith.constant 0 : i32
    return %c0_i32, %c0_i32_0 : i32, i32
  }
  func.func @transform_15(%arg0: i32) -> (i32, i32) {
    %c0_i32 = arith.constant 0 : i32
    %c0_i32_0 = arith.constant 0 : i32
    return %arg0, %c0_i32 : i32, i32
  }
}

</mosaic_0001>

<llo_original>
// kernel: lenet_forward.1
$region0: #{lenet_forward.1}
  #allocation0 [shape = 'u32[]', space=smem, size = 0x4, offset = 0x4, fixed_abs, tag = 'smem constant byte address 0x4 - core index']
  #allocation1 [shape = 'u32[144,128]{1,0:T(1,128)}', space=vmem, size = 0x12000, scoped, tag = 'internal scratch']
  #allocation2 [shape = 'f32[40,84]{1,0:T(8,128)}', space=vmem, size = 0x5000, scoped, tag = 'scratch operand']
  #allocation3 [shape = 'f32[16,80]{1,0:T(8,128)}', space=vmem, size = 0x2000, scoped, tag = 'scratch operand']
  %s0 = inlined_call_operand.hbm [shape: f32[1,72,32], index: 0, kind: input, shape index: {}]
  %s1 = inlined_call_operand.hbm [shape: f32[160,168], index: 1, kind: input, shape index: {}]
  %s2 = inlined_call_operand.hbm [shape: f32[1,168], index: 2, kind: input, shape index: {}]
  %s3 = inlined_call_operand.hbm [shape: f32[168,84], index: 3, kind: input, shape index: {}]
  %s4 = inlined_call_operand.hbm [shape: f32[168,84], index: 4, kind: input, shape index: {}]
  %s5 = inlined_call_operand.hbm [shape: f32[420,160], index: 5, kind: input, shape index: {}]
  %s6 = inlined_call_operand.hbm [shape: f32[1,160], index: 6, kind: input, shape index: {}]
  %s7 = inlined_call_operand.hbm [shape: f32[160,80], index: 7, kind: input, shape index: {}]
  %s8 = inlined_call_operand.hbm [shape: f32[160,80], index: 8, kind: input, shape index: {}]
  %s9 = inlined_call_operand.hbm [shape: f32[400,128], index: 9, kind: input, shape index: {}]
  %s10 = inlined_call_operand.hbm [shape: f32[1,128], index: 10, kind: input, shape index: {}]
  %s11 = inlined_call_operand.hbm [shape: f32[128,128], index: 11, kind: input, shape index: {}]
  %s12 = inlined_call_operand.hbm [shape: f32[1,128], index: 12, kind: input, shape index: {}]
  %s13 = inlined_call_operand.hbm [shape: f32[128,128], index: 13, kind: input, shape index: {}]
  %s14 = inlined_call_operand.hbm [shape: f32[1,128], index: 14, kind: input, shape index: {}]
  %s15 = inlined_call_operand.hbm [shape: f32[2,128], index: 15, kind: output, shape index: {}]
  %s16 = sld [smem:[#allocation0]]
  $region130: #{lenet_forward.1} parent=0
    _
  %s18 = ssub.s32 1, %s16
  %s19 = scalar_select 0, %s18, %s16
  $region1: #{lenet_forward.1} parent=0
    #allocation4 [shape = 'u8[36864]{0}', space=vmem, size = 0x9000, scoped, tag = 'input window, operand 0, single buffered']
    #allocation5 [shape = 's32[1]{0}', space=sflag, size = 0x4, scoped, tag = 'scoped memory for lenet_forward.1']
    #allocation6 [shape = 's32[1]{0}', space=sflag, size = 0x4, scoped, tag = 'scoped memory for lenet_forward.1']
    #allocation7 [shape = 'u8[163840]{0}', space=vmem, size = 0x28000, scoped, tag = 'input window, operand 1, single buffered']
    #allocation8 [shape = 's32[1]{0}', space=sflag, size = 0x4, scoped, tag = 'scoped memory for lenet_forward.1']
    #allocation9 [shape = 'u8[1024]{0}', space=vmem, size = 0x400, scoped, tag = 'input window, operand 2, single buffered']
    #allocation10 [shape = 'u8[86016]{0}', space=vmem, size = 0x15000, scoped, tag = 'input window, operand 3, single buffered']
    #allocation11 [shape = 's32[1]{0}', space=sflag, size = 0x4, scoped, tag = 'scoped memory for lenet_forward.1']
    #allocation12 [shape = 'u8[86016]{0}', space=vmem, size = 0x15000, scoped, tag = 'input window, operand 4, single buffered']
    #allocation13 [shape = 'u8[434176]{0}', space=vmem, size = 0x6a000, scoped, tag = 'input window, operand 5, single buffered']
    #allocation14 [shape = 's32[1]{0}', space=sflag, size = 0x4, scoped, tag = 'scoped memory for lenet_forward.1']
    #allocation15 [shape = 'u8[1024]{0}', space=vmem, size = 0x400, scoped, tag = 'input window, operand 6, single buffered']
    #allocation16 [shape = 'u8[81920]{0}', space=vmem, size = 0x14000, scoped, tag = 'input window, operand 7, single buffered']
    #allocation17 [shape = 's32[1]{0}', space=sflag, size = 0x4, scoped, tag = 'scoped memory for lenet_forward.1']
    #allocation18 [shape = 'u8[81920]{0}', space=vmem, size = 0x14000, scoped, tag = 'input window, operand 8, single buffered']
    #allocation19 [shape = 'u8[204800]{0}', space=vmem, size = 0x32000, scoped, tag = 'input window, operand 9, single buffered']
    #allocation20 [shape = 's32[1]{0}', space=sflag, size = 0x4, scoped, tag = 'scoped memory for lenet_forward.1']
    #allocation21 [shape = 'u8[512]{0}', space=vmem, size = 0x400, scoped, tag = 'input window, operand 10, single buffered']
    #allocation22 [shape = 'u8[65536]{0}', space=vmem, size = 0x10000, scoped, tag = 'input window, operand 11, single buffered']
    #allocation23 [shape = 's32[1]{0}', space=sflag, size = 0x4, scoped, tag = 'scoped memory for lenet_forward.1']
    #allocation24 [shape = 'u8[512]{0}', space=vmem, size = 0x400, scoped, tag = 'input window, operand 12, single buffered']
    #allocation25 [shape = 'u8[65536]{0}', space=vmem, size = 0x10000, scoped, tag = 'input window, operand 13, single buffered']
    #allocation26 [shape = 's32[1]{0}', space=sflag, size = 0x4, scoped, tag = 'scoped memory for lenet_forward.1']
    #allocation27 [shape = 'u8[512]{0}', space=vmem, size = 0x400, scoped, tag = 'input window, operand 14, single buffered']
    #allocation28 [shape = 'u8[1024]{0}', space=vmem, size = 0x400, scoped, tag = 'output window, operand 0, single buffered']
    %20 = vsyncpa [#allocation5], 0
    %21 = vsyncpa [#allocation8], 0
    %22 = vsyncpa [#allocation11], 0
    %23 = vsyncpa [#allocation14], 0
    %24 = vsyncpa [#allocation17], 0
    %25 = vsyncpa [#allocation20], 0
    %26 = vsyncpa [#allocation23], 0
    %27 = vsyncpa [#allocation26], 0
    %28 = vsyncpa [#allocation6], 0
    // Predicated region
    $region2: #{lenet_forward.1} parent=1 // pred_check
      _
    $region3: #{lenet_forward.1} parent=1 // pred_check_branch
      %30 = sbr.rel (0) target = $region5
    $region4: #{lenet_forward.1} parent=1 // pred_region
      %s32 = ssub.s32 1152, 1152
      %33 = vsyncadd [#allocation5], %s32
      %s34 = sshll.u32 [#allocation4], 4
      %s35 = int_to_ptr.vmem [resolvable:$true] %s34
      %40 = dma.hbm_to_vmem [thread:$0]  %s0, 1152, %s35, [#allocation5], 128, 128, 8
    $region5: #{lenet_forward.1} parent=1 // pred_fallthru
      _
    // Predicated region
    $region6: #{lenet_forward.1} parent=1 // pred_check
      _
    $region7: #{lenet_forward.1} parent=1 // pred_check_branch
      %42 = sbr.rel (0) target = $region9
    $region8: #{lenet_forward.1} parent=1 // pred_region
      %s44 = ssub.s32 5120, 5120
      %45 = vsyncadd [#allocation8], %s44
      %s46 = sshll.u32 [#allocation7], 4
      %s47 = int_to_ptr.vmem [resolvable:$true] %s46
      %52 = dma.hbm_to_vmem [thread:$0]  %s1, 5120, %s47, [#allocation8], 256, 256, 16
    $region9: #{lenet_forward.1} parent=1 // pred_fallthru
      _
    // Predicated region
    $region10: #{lenet_forward.1} parent=1 // pred_check
      _
    $region11: #{lenet_forward.1} parent=1 // pred_check_branch
      %54 = sbr.rel (0) target = $region13
    $region12: #{lenet_forward.1} parent=1 // pred_region
      %s56 = ssub.s32 32, 32
      %57 = vsyncadd [#allocation8], %s56
      %s59 = sshll.u32 [#allocation9], 4
      %s60 = int_to_ptr.vmem [resolvable:$true] %s59
      %62 = dma.hbm_to_vmem [thread:$0]  %s2, 32, %s60, [#allocation8]
    $region13: #{lenet_forward.1} parent=1 // pred_fallthru
      _
    // Predicated region
    $region14: #{lenet_forward.1} parent=1 // pred_check
      _
    $region15: #{lenet_forward.1} parent=1 // pred_check_branch
      %64 = sbr.rel (0) target = $region17
    $region16: #{lenet_forward.1} parent=1 // pred_region
      %s66 = ssub.s32 2688, 2688
      %67 = vsyncadd [#allocation11], %s66
      %s68 = sshll.u32 [#allocation10], 4
      %s69 = int_to_ptr.vmem [resolvable:$true] %s68
      %74 = dma.hbm_to_vmem [thread:$0]  %s3, 2688, %s69, [#allocation11], 128, 128, 8
    $region17: #{lenet_forward.1} parent=1 // pred_fallthru
      _
    // Predicated region
    $region18: #{lenet_forward.1} parent=1 // pred_check
      _
    $region19: #{lenet_forward.1} parent=1 // pred_check_branch
      %76 = sbr.rel (0) target = $region21
    $region20: #{lenet_forward.1} parent=1 // pred_region
      %s78 = ssub.s32 2688, 2688
      %79 = vsyncadd [#allocation11], %s78
      %s80 = sshll.u32 [#allocation12], 4
      %s81 = int_to_ptr.vmem [resolvable:$true] %s80
      %86 = dma.hbm_to_vmem [thread:$0]  %s4, 2688, %s81, [#allocation11], 128, 128, 8
    $region21: #{lenet_forward.1} parent=1 // pred_fallthru
      _
    // Predicated region
    $region22: #{lenet_forward.1} parent=1 // pred_check
      _
    $region23: #{lenet_forward.1} parent=1 // pred_check_branch
      %88 = sbr.rel (0) target = $region25
    $region24: #{lenet_forward.1} parent=1 // pred_region
      %s90 = ssub.s32 13568, 13568
      %91 = vsyncadd [#allocation14], %s90
      %s92 = sshll.u32 [#allocation13], 4
      %s93 = int_to_ptr.vmem [resolvable:$true] %s92
      %98 = dma.hbm_to_vmem [thread:$0]  %s5, 13568, %s93, [#allocation14], 256, 256, 16
    $region25: #{lenet_forward.1} parent=1 // pred_fallthru
      _
    // Predicated region
    $region26: #{lenet_forward.1} parent=1 // pred_check
      _
    $region27: #{lenet_forward.1} parent=1 // pred_check_branch
      %100 = sbr.rel (0) target = $region29
    $region28: #{lenet_forward.1} parent=1 // pred_region
      %s102 = ssub.s32 32, 32
      %103 = vsyncadd [#allocation14], %s102
      %s105 = sshll.u32 [#allocation15], 4
      %s106 = int_to_ptr.vmem [resolvable:$true] %s105
      %108 = dma.hbm_to_vmem [thread:$0]  %s6, 32, %s106, [#allocation14]
    $region29: #{lenet_forward.1} parent=1 // pred_fallthru
      _
    // Predicated region
    $region30: #{lenet_forward.1} parent=1 // pred_check
      _
    $region31: #{lenet_forward.1} parent=1 // pred_check_branch
      %110 = sbr.rel (0) target = $region33
    $region32: #{lenet_forward.1} parent=1 // pred_region
      %s112 = ssub.s32 2560, 2560
      %113 = vsyncadd [#allocation17], %s112
      %s114 = sshll.u32 [#allocation16], 4
      %s115 = int_to_ptr.vmem [resolvable:$true] %s114
      %120 = dma.hbm_to_vmem [thread:$0]  %s7, 2560, %s115, [#allocation17], 128, 128, 8
    $region33: #{lenet_forward.1} parent=1 // pred_fallthru
      _
    // Predicated region
    $region34: #{lenet_forward.1} parent=1 // pred_check
      _
    $region35: #{lenet_forward.1} parent=1 // pred_check_branch
      %122 = sbr.rel (0) target = $region37
    $region36: #{lenet_forward.1} parent=1 // pred_region
      %s124 = ssub.s32 2560, 2560
      %125 = vsyncadd [#allocation17], %s124
      %s126 = sshll.u32 [#allocation18], 4
      %s127 = int_to_ptr.vmem [resolvable:$true] %s126
      %132 = dma.hbm_to_vmem [thread:$0]  %s8, 2560, %s127, [#allocation17], 128, 128, 8
    $region37: #{lenet_forward.1} parent=1 // pred_fallthru
      _
    // Predicated region
    $region38: #{lenet_forward.1} parent=1 // pred_check
      _
    $region39: #{lenet_forward.1} parent=1 // pred_check_branch
      %134 = sbr.rel (0) target = $region41
    $region40: #{lenet_forward.1} parent=1 // pred_region
      %s136 = ssub.s32 6400, 6400
      %137 = vsyncadd [#allocation20], %s136
      %s138 = sshll.u32 [#allocation19], 4
      %s139 = int_to_ptr.vmem [resolvable:$true] %s138
      %144 = dma.hbm_to_vmem [thread:$0]  %s9, 6400, %s139, [#allocation20], 128, 128, 8
    $region41: #{lenet_forward.1} parent=1 // pred_fallthru
      _
    // Predicated region
    $region42: #{lenet_forward.1} parent=1 // pred_check
      _
    $region43: #{lenet_forward.1} parent=1 // pred_check_branch
      %146 = sbr.rel (0) target = $region45
    $region44: #{lenet_forward.1} parent=1 // pred_region
      %s148 = ssub.s32 16, 16
      %149 = vsyncadd [#allocation20], %s148
      %s151 = sshll.u32 [#allocation21], 4
      %s152 = int_to_ptr.vmem [resolvable:$true] %s151
      %154 = dma.hbm_to_vmem [thread:$0]  %s10, 16, %s152, [#allocation20]
    $region45: #{lenet_forward.1} parent=1 // pred_fallthru
      _
    // Predicated region
    $region46: #{lenet_forward.1} parent=1 // pred_check
      _
    $region47: #{lenet_forward.1} parent=1 // pred_check_branch
      %156 = sbr.rel (0) target = $region49
    $region48: #{lenet_forward.1} parent=1 // pred_region
      %s158 = ssub.s32 2048, 2048
      %159 = vsyncadd [#allocation23], %s158
      %s160 = sshll.u32 [#allocation22], 4
      %s161 = int_to_ptr.vmem [resolvable:$true] %s160
      %166 = dma.hbm_to_vmem [thread:$0]  %s11, 2048, %s161, [#allocation23], 128, 128, 8
    $region49: #{lenet_forward.1} parent=1 // pred_fallthru
      _
    // Predicated region
    $region50: #{lenet_forward.1} parent=1 // pred_check
      _
    $region51: #{lenet_forward.1} parent=1 // pred_check_branch
      %168 = sbr.rel (0) target = $region53
    $region52: #{lenet_forward.1} parent=1 // pred_region
      %s170 = ssub.s32 16, 16
      %171 = vsyncadd [#allocation23], %s170
      %s173 = sshll.u32 [#allocation24], 4
      %s174 = int_to_ptr.vmem [resolvable:$true] %s173
      %176 = dma.hbm_to_vmem [thread:$0]  %s12, 16, %s174, [#allocation23]
    $region53: #{lenet_forward.1} parent=1 // pred_fallthru
      _
    // Predicated region
    $region54: #{lenet_forward.1} parent=1 // pred_check
      _
    $region55: #{lenet_forward.1} parent=1 // pred_check_branch
      %178 = sbr.rel (0) target = $region57
    $region56: #{lenet_forward.1} parent=1 // pred_region
      %s180 = ssub.s32 2048, 2048
      %181 = vsyncadd [#allocation26], %s180
      %s182 = sshll.u32 [#allocation25], 4
      %s183 = int_to_ptr.vmem [resolvable:$true] %s182
      %188 = dma.hbm_to_vmem [thread:$0]  %s13, 2048, %s183, [#allocation26], 128, 128, 8
    $region57: #{lenet_forward.1} parent=1 // pred_fallthru
      _
    // Predicated region
    $region58: #{lenet_forward.1} parent=1 // pred_check
      _
    $region59: #{lenet_forward.1} parent=1 // pred_check_branch
      %190 = sbr.rel (0) target = $region61
    $region60: #{lenet_forward.1} parent=1 // pred_region
      %s192 = ssub.s32 16, 16
      %193 = vsyncadd [#allocation26], %s192
      %s195 = sshll.u32 [#allocation27], 4
      %s196 = int_to_ptr.vmem [resolvable:$true] %s195
      %198 = dma.hbm_to_vmem [thread:$0]  %s14, 16, %s196, [#allocation26]
    $region61: #{lenet_forward.1} parent=1 // pred_fallthru
      _
    // Predicated region
    $region62: #{lenet_forward.1} parent=1 // pred_check
      _
    $region63: #{lenet_forward.1} parent=1 // pred_check_branch
      %200 = sbr.rel (0) target = $region65
    $region64: #{lenet_forward.1} parent=1 // pred_region
      %201 = dma.done [#allocation5], 1152
    $region65: #{lenet_forward.1} parent=1 // pred_fallthru
      _
    // Predicated region
    $region66: #{lenet_forward.1} parent=1 // pred_check
      _
    $region67: #{lenet_forward.1} parent=1 // pred_check_branch
      %203 = sbr.rel (0) target = $region69
    $region68: #{lenet_forward.1} parent=1 // pred_region
      %204 = dma.done [#allocation8], 5120
    $region69: #{lenet_forward.1} parent=1 // pred_fallthru
      _
    // Predicated region
    $region70: #{lenet_forward.1} parent=1 // pred_check
      _
    $region71: #{lenet_forward.1} parent=1 // pred_check_branch
      %206 = sbr.rel (0) target = $region73
    $region72: #{lenet_forward.1} parent=1 // pred_region
      %207 = dma.done [#allocation8], 32
    $region73: #{lenet_forward.1} parent=1 // pred_fallthru
      _
    // Predicated region
    $region74: #{lenet_forward.1} parent=1 // pred_check
      _
    $region75: #{lenet_forward.1} parent=1 // pred_check_branch
      %209 = sbr.rel (0) target = $region77
    $region76: #{lenet_forward.1} parent=1 // pred_region
      %210 = dma.done [#allocation11], 2688
    $region77: #{lenet_forward.1} parent=1 // pred_fallthru
      _
    // Predicated region
    $region78: #{lenet_forward.1} parent=1 // pred_check
      _
    $region79: #{lenet_forward.1} parent=1 // pred_check_branch
      %212 = sbr.rel (0) target = $region81
    $region80: #{lenet_forward.1} parent=1 // pred_region
      %213 = dma.done [#allocation11], 2688
    $region81: #{lenet_forward.1} parent=1 // pred_fallthru
      _
    // Predicated region
    $region82: #{lenet_forward.1} parent=1 // pred_check
      _
    $region83: #{lenet_forward.1} parent=1 // pred_check_branch
      %215 = sbr.rel (0) target = $region85
    $region84: #{lenet_forward.1} parent=1 // pred_region
      %216 = dma.done [#allocation14], 13568
    $region85: #{lenet_forward.1} parent=1 // pred_fallthru
      _
    // Predicated region
    $region86: #{lenet_forward.1} parent=1 // pred_check
      _
    $region87: #{lenet_forward.1} parent=1 // pred_check_branch
      %218 = sbr.rel (0) target = $region89
    $region88: #{lenet_forward.1} parent=1 // pred_region
      %219 = dma.done [#allocation14], 32
    $region89: #{lenet_forward.1} parent=1 // pred_fallthru
      _
    // Predicated region
    $region90: #{lenet_forward.1} parent=1 // pred_check
      _
    $region91: #{lenet_forward.1} parent=1 // pred_check_branch
      %221 = sbr.rel (0) target = $region93
    $region92: #{lenet_forward.1} parent=1 // pred_region
      %222 = dma.done [#allocation17], 2560
    $region93: #{lenet_forward.1} parent=1 // pred_fallthru
      _
    // Predicated region
    $region94: #{lenet_forward.1} parent=1 // pred_check
      _
    $region95: #{lenet_forward.1} parent=1 // pred_check_branch
      %224 = sbr.rel (0) target = $region97
    $region96: #{lenet_forward.1} parent=1 // pred_region
      %225 = dma.done [#allocation17], 2560
    $region97: #{lenet_forward.1} parent=1 // pred_fallthru
      _
    // Predicated region
    $region98: #{lenet_forward.1} parent=1 // pred_check
      _
    $region99: #{lenet_forward.1} parent=1 // pred_check_branch
      %227 = sbr.rel (0) target = $region101
    $region100: #{lenet_forward.1} parent=1 // pred_region
      %228 = dma.done [#allocation20], 6400
    $region101: #{lenet_forward.1} parent=1 // pred_fallthru
      _
    // Predicated region
    $region102: #{lenet_forward.1} parent=1 // pred_check
      _
    $region103: #{lenet_forward.1} parent=1 // pred_check_branch
      %230 = sbr.rel (0) target = $region105
    $region104: #{lenet_forward.1} parent=1 // pred_region
      %231 = dma.done [#allocation20], 16
    $region105: #{lenet_forward.1} parent=1 // pred_fallthru
      _
    // Predicated region
    $region106: #{lenet_forward.1} parent=1 // pred_check
      _
    $region107: #{lenet_forward.1} parent=1 // pred_check_branch
      %233 = sbr.rel (0) target = $region109
    $region108: #{lenet_forward.1} parent=1 // pred_region
      %234 = dma.done [#allocation23], 2048
    $region109: #{lenet_forward.1} parent=1 // pred_fallthru
      _
    // Predicated region
    $region110: #{lenet_forward.1} parent=1 // pred_check
      _
    $region111: #{lenet_forward.1} parent=1 // pred_check_branch
      %236 = sbr.rel (0) target = $region113
    $region112: #{lenet_forward.1} parent=1 // pred_region
      %237 = dma.done [#allocation23], 16
    $region113: #{lenet_forward.1} parent=1 // pred_fallthru
      _
    // Predicated region
    $region114: #{lenet_forward.1} parent=1 // pred_check
      _
    $region115: #{lenet_forward.1} parent=1 // pred_check_branch
      %239 = sbr.rel (0) target = $region117
    $region116: #{lenet_forward.1} parent=1 // pred_region
      %240 = dma.done [#allocation26], 2048
    $region117: #{lenet_forward.1} parent=1 // pred_fallthru
      _
    // Predicated region
    $region118: #{lenet_forward.1} parent=1 // pred_check
      _
    $region119: #{lenet_forward.1} parent=1 // pred_check_branch
      %242 = sbr.rel (0) target = $region121
    $region120: #{lenet_forward.1} parent=1 // pred_region
      %243 = dma.done [#allocation26], 16
    $region121: #{lenet_forward.1} parent=1 // pred_fallthru
      _
    %v244 = vld [vmem:[#allocation4] ss:$2 sm:$0xff]
    %s245 = scalar_lea.vmem [#allocation4], 16
    %v246 = vld [vmem:[%s245] ss:$2 sm:$0xff]
    %s247 = scalar_lea.vmem [#allocation4], 32
    %v248 = vld [vmem:[%s247] ss:$2 sm:$0xff]
    %s249 = scalar_lea.vmem [#allocation4], 48
    %v250 = vld [vmem:[%s249] ss:$2 sm:$0xff]
    %s251 = scalar_lea.vmem [#allocation4], 1
    %v252 = vld [vmem:[%s251] ss:$2 sm:$0xff]
    %s253 = scalar_lea.vmem [#allocation4], 17
    %v254 = vld [vmem:[%s253] ss:$2 sm:$0xff]
    %s255 = scalar_lea.vmem [#allocation4], 33
    %v256 = vld [vmem:[%s255] ss:$2 sm:$0xff]
    %s257 = scalar_lea.vmem [#allocation4], 49
    %v258 = vld [vmem:[%s257] ss:$2 sm:$0xff]
    %s259 = scalar_lea.vmem [#allocation4], 2
    %v260 = vld [vmem:[%s259] ss:$2 sm:$0xff]
    %s261 = scalar_lea.vmem [#allocation4], 18
    %v262 = vld [vmem:[%s261] ss:$2 sm:$0xff]
    %s263 = scalar_lea.vmem [#allocation4], 34
    %v264 = vld [vmem:[%s263] ss:$2 sm:$0xff]
    %s265 = scalar_lea.vmem [#allocation4], 50
    %v266 = vld [vmem:[%s265] ss:$2 sm:$0xff]
    %s267 = scalar_lea.vmem [#allocation4], 3
    %v268 = vld [vmem:[%s267] ss:$2 sm:$0xff]
    %s269 = scalar_lea.vmem [#allocation4], 19
    %v270 = vld [vmem:[%s269] ss:$2 sm:$0xff]
    %s271 = scalar_lea.vmem [#allocation4], 35
    %v272 = vld [vmem:[%s271] ss:$2 sm:$0xff]
    %s273 = scalar_lea.vmem [#allocation4], 51
    %v274 = vld [vmem:[%s273] ss:$2 sm:$0xff]
    %s275 = scalar_lea.vmem [#allocation4], 4
    %v276 = vld [vmem:[%s275] ss:$2 sm:$0xff]
    %s277 = scalar_lea.vmem [#allocation4], 20
    %v278 = vld [vmem:[%s277] ss:$2 sm:$0xff]
    %s279 = scalar_lea.vmem [#allocation4], 36
    %v280 = vld [vmem:[%s279] ss:$2 sm:$0xff]
    %s281 = scalar_lea.vmem [#allocation4], 52
    %v282 = vld [vmem:[%s281] ss:$2 sm:$0xff]
    %287 = vrot.lane.b32.xlu0 %v252, 32
    %v288 = vpop.permute.xlu0 %287
    %289 = vrot.lane.b32.xlu0 %v254, 32
    %v290 = vpop.permute.xlu0 %289
    %291 = vrot.lane.b32.xlu0 %v256, 32
    %v292 = vpop.permute.xlu0 %291
    %293 = vrot.lane.b32.xlu0 %v258, 32
    %v294 = vpop.permute.xlu0 %293
    %303 = vrot.lane.b32.xlu0 %v260, 64
    %v304 = vpop.permute.xlu0 %303
    %305 = vrot.lane.b32.xlu0 %v262, 64
    %v306 = vpop.permute.xlu0 %305
    %307 = vrot.lane.b32.xlu0 %v264, 64
    %v308 = vpop.permute.xlu0 %307
    %309 = vrot.lane.b32.xlu0 %v266, 64
    %v310 = vpop.permute.xlu0 %309
    %319 = vrot.lane.b32.xlu0 %v268, 96
    %v320 = vpop.permute.xlu0 %319
    %321 = vrot.lane.b32.xlu0 %v270, 96
    %v322 = vpop.permute.xlu0 %321
    %323 = vrot.lane.b32.xlu0 %v272, 96
    %v324 = vpop.permute.xlu0 %323
    %325 = vrot.lane.b32.xlu0 %v274, 96
    %v326 = vpop.permute.xlu0 %325
    %vm331 = vcmask 261120
    %v332 = vsel %vm331, %v244, %v288
    %v333 = vsel %vm331, %v246, %v290
    %v334 = vsel %vm331, %v248, %v292
    %v335 = vsel %vm331, %v250, %v294
    %vm336 = vcmask 523264
    %v337 = vsel %vm336, %v332, %v304
    %v338 = vsel %vm336, %v333, %v306
    %v339 = vsel %vm336, %v334, %v308
    %v340 = vsel %vm336, %v335, %v310
    %vm341 = vcmask 785408
    %v342 = vsel %vm341, %v337, %v320
    %v343 = vsel %vm341, %v338, %v322
    %v344 = vsel %vm341, %v339, %v324
    %v345 = vsel %vm341, %v340, %v326
    %s346 = scalar_lea.vmem [#allocation4], 5
    %v347 = vld [vmem:[%s346] ss:$2 sm:$0xff]
    %s348 = scalar_lea.vmem [#allocation4], 21
    %v349 = vld [vmem:[%s348] ss:$2 sm:$0xff]
    %s350 = scalar_lea.vmem [#allocation4], 37
    %v351 = vld [vmem:[%s350] ss:$2 sm:$0xff]
    %s352 = scalar_lea.vmem [#allocation4], 53
    %v353 = vld [vmem:[%s352] ss:$2 sm:$0xff]
    %354 = vrot.lane.b32.xlu0 %v260, 32
    %v355 = vpop.permute.xlu0 %354
    %356 = vrot.lane.b32.xlu0 %v262, 32
    %v357 = vpop.permute.xlu0 %356
    %358 = vrot.lane.b32.xlu0 %v264, 32
    %v359 = vpop.permute.xlu0 %358
    %360 = vrot.lane.b32.xlu0 %v266, 32
    %v361 = vpop.permute.xlu0 %360
    %366 = vrot.lane.b32.xlu0 %v268, 64
    %v367 = vpop.permute.xlu0 %366
    %368 = vrot.lane.b32.xlu0 %v270, 64
    %v369 = vpop.permute.xlu0 %368
    %370 = vrot.lane.b32.xlu0 %v272, 64
    %v371 = vpop.permute.xlu0 %370
    %372 = vrot.lane.b32.xlu0 %v274, 64
    %v373 = vpop.permute.xlu0 %372
    %382 = vrot.lane.b32.xlu0 %v276, 96
    %v383 = vpop.permute.xlu0 %382
    %384 = vrot.lane.b32.xlu0 %v278, 96
    %v385 = vpop.permute.xlu0 %384
    %386 = vrot.lane.b32.xlu0 %v280, 96
    %v387 = vpop.permute.xlu0 %386
    %388 = vrot.lane.b32.xlu0 %v282, 96
    %v389 = vpop.permute.xlu0 %388
    %v394 = vsel %vm331, %v252, %v355
    %v395 = vsel %vm331, %v254, %v357
    %v396 = vsel %vm331, %v256, %v359
    %v397 = vsel %vm331, %v258, %v361
    %v398 = vsel %vm336, %v394, %v367
    %v399 = vsel %vm336, %v395, %v369
    %v400 = vsel %vm336, %v396, %v371
    %v401 = vsel %vm336, %v397, %v373
    %v402 = vsel %vm341, %v398, %v383
    %v403 = vsel %vm341, %v399, %v385
    %v404 = vsel %vm341, %v400, %v387
    %v405 = vsel %vm341, %v401, %v389
    %v406 = vld [vmem:[#allocation7] sm:$0xff]
    %v407 = vld [vmem:[#allocation7 + $0x8] sm:$0xff]
    %v408 = vld [vmem:[#allocation7 + $0x10] sm:$0xff]
    %v409 = vld [vmem:[#allocation7 + $0x18] sm:$0xff]
    %v410 = vld [vmem:[#allocation7 + $0x20] sm:$0xff]
    %v411 = vld [vmem:[#allocation7 + $0x28] sm:$0xff]
    %v412 = vld [vmem:[#allocation7 + $0x30] sm:$0xff]
    %v413 = vld [vmem:[#allocation7 + $0x38] sm:$0xff]
    %v414 = vld [vmem:[#allocation7 + $0x40] sm:$0xff]
    %v415 = vld [vmem:[#allocation7 + $0x48] sm:$0xff]
    %v416 = vld [vmem:[#allocation7 + $0x50] sm:$0xff]
    %v417 = vld [vmem:[#allocation7 + $0x58] sm:$0xff]
    %v418 = vld [vmem:[#allocation7 + $0x60] sm:$0xff]
    %v419 = vld [vmem:[#allocation7 + $0x68] sm:$0xff]
    %v420 = vld [vmem:[#allocation7 + $0x70] sm:$0xff]
    %v421 = vld [vmem:[#allocation7 + $0x78] sm:$0xff]
    %v422 = vld [vmem:[#allocation7 + $0x80] sm:$0xff]
    %v423 = vld [vmem:[#allocation7 + $0x88] sm:$0xff]
    %v424 = vld [vmem:[#allocation7 + $0x90] sm:$0xff]
    %v425 = vld [vmem:[#allocation7 + $0x98] sm:$0xff]
    %v426 = vld [vmem:[#allocation7 + $0xa0] sm:$0xff]
    %v427 = vld [vmem:[#allocation7 + $0xa8] sm:$0xff]
    %v428 = vld [vmem:[#allocation7 + $0xb0] sm:$0xff]
    %v429 = vld [vmem:[#allocation7 + $0xb8] sm:$0xff]
    %v430 = vld [vmem:[#allocation7 + $0xc0] sm:$0xff]
    %v431 = vld [vmem:[#allocation7 + $0xc8] sm:$0xff]
    %v432 = vld [vmem:[#allocation7 + $0xd0] sm:$0xff]
    %v433 = vld [vmem:[#allocation7 + $0xd8] sm:$0xff]
    %v434 = vld [vmem:[#allocation7 + $0xe0] sm:$0xff]
    %v435 = vld [vmem:[#allocation7 + $0xe8] sm:$0xff]
    %v436 = vld [vmem:[#allocation7 + $0xf0] sm:$0xff]
    %v437 = vld [vmem:[#allocation7 + $0xf8] sm:$0xff]
    %v438 = vld [vmem:[#allocation7 + $0x100] sm:$0xff]
    %v439 = vld [vmem:[#allocation7 + $0x108] sm:$0xff]
    %v440 = vld [vmem:[#allocation7 + $0x110] sm:$0xff]
    %v441 = vld [vmem:[#allocation7 + $0x118] sm:$0xff]
    %v442 = vld [vmem:[#allocation7 + $0x120] sm:$0xff]
    %v443 = vld [vmem:[#allocation7 + $0x128] sm:$0xff]
    %v444 = vld [vmem:[#allocation7 + $0x130] sm:$0xff]
    %v445 = vld [vmem:[#allocation7 + $0x138] sm:$0xff]
    %v446 = vld [vmem:[#allocation9] sm:$0x3]
    %v448 = vlaneseq
    %v449 = vshrl.u32 %v448, 7
    %v450 = vsub.s32 0, %v449
    %v451 = vrot.slane %v446, %v450
    %v452 = vlaneseq
    %v453 = vshrl.u32 %v452, 7
    %v454 = vsub.s32 1, %v453
    %v455 = vrot.slane %v446, %v454
    %v458 = vsel %vm331, %v276, 0
    %v460 = vsel %vm331, %v278, 0
    %v462 = vsel %vm331, %v280, 0
    %v464 = vsel %vm331, %v282, 0
    %466 = vmatprep.subr.mxu0 %v407
    %467 = vmatpush1.msra.mxu0 %v406
    %468 = vmatprep.subr.mxu0 %v409
    %469 = vmatpush1.msra.mxu0 %v408
    %470 = vmatprep.subr.mxu0 %v411
    %471 = vmatpush1.msra.mxu0 %v410
    %472 = vmatprep.subr.mxu0 %v413
    %473 = vmatpush1.msra.mxu0 %v412
    %474 = vmatprep.subr.mxu0 %v415
    %475 = vmatpush1.msra.mxu0 %v414
    %476 = vmatprep.subr.mxu0 %v417
    %477 = vmatpush1.msra.mxu0 %v416
    %478 = vmatprep.subr.mxu0 %v419
    %479 = vmatpush1.msra.mxu0 %v418
    %480 = vmatprep.subr.mxu0 %v421
    %481 = vmatpush1.msra.mxu0 %v420
    %482 = vmatprep.subr.mxu0 %v423
    %483 = vmatpush1.msra.mxu0 %v422
    %484 = vmatprep.subr.mxu0 %v425
    %485 = vmatpush1.msra.mxu0 %v424
    %486 = vmatprep.subr.mxu0 %v427
    %487 = vmatpush1.msra.mxu0 %v426
    %488 = vmatprep.subr.mxu0 %v429
    %489 = vmatpush1.msra.mxu0 %v428
    %490 = vmatprep.subr.mxu0 %v431
    %491 = vmatpush1.msra.mxu0 %v430
    %492 = vmatprep.subr.mxu0 %v433
    %493 = vmatpush1.msra.mxu0 %v432
    %494 = vmatprep.subr.mxu0 %v435
    %495 = vmatpush1.msra.mxu0 %v434
    %496 = vmatprep.subr.mxu0 %v437
    %497 = vmatpush1.msra.mxu0 %v436
    %498 = vmatprep.subr.mxu0 %v439
    %499 = vmatpush1.msra.mxu0 %v438
    %500 = vmatprep.subr.mxu0 %v441
    %501 = vmatpush1.msra.mxu0 %v440
    %502 = vmatprep.subr.mxu0 %v443
    %503 = vmatpush1.msra.mxu0 %v442
    %504 = vmatprep.subr.mxu0 %v445
    %505 = vmatpush1.msra.mxu0 %v444
    %506 = vmatprep.subr.mxu0 0.0
    %507 = vmatpush1.msra.mxu0 0.0
    %508 = vmatprep.subr.mxu0 0.0
    %509 = vmatpush1.msra.mxu0 0.0
    %510 = vmatprep.subr.mxu0 0.0
    %511 = vmatpush1.msra.mxu0 0.0
    %512 = vmatprep.subr.mxu0 0.0
    %513 = vmatpush1.msra.mxu0 0.0
    %514 = vmatprep.subr.mxu0 0.0
    %515 = vmatpush1.msra.mxu0 0.0
    %516 = vmatprep.subr.mxu0 0.0
    %517 = vmatpush1.msra.mxu0 0.0
    %518 = vmatprep.subr.mxu0 0.0
    %519 = vmatpush1.msra.mxu0 0.0
    %520 = vmatprep.subr.mxu0 0.0
    %521 = vmatpush1.msra.mxu0 0.0
    %522 = vmatprep.subr.mxu0 0.0
    %523 = vmatpush1.msra.mxu0 0.0
    %524 = vmatprep.subr.mxu0 0.0
    %525 = vmatpush1.msra.mxu0 0.0
    %526 = vmatprep.subr.mxu0 0.0
    %527 = vmatpush1.msra.mxu0 0.0
    %528 = vmatprep.subr.mxu0 0.0
    %529 = vmatpush1.msra.mxu0 0.0
    %530 = vmatprep.mubr.f32.mxu0 %v458
    %531 = vmatmul.mubr.f32.gmra.mrb[0].mxu0 %v342
    %v532 = vpop.f32.mrb[0].mxu0
    %v533 = vadd.f32 %v451, %v532
    %v534 = vpop.f32.mrb[0].mxu0
    %v535 = vadd.f32 %v455, %v534
    %536 = vmatprep.mubr.f32.mxu0 %v460
    %537 = vmatmul.mubr.f32.gmra.mrb[0].mxu0 %v343
    %v538 = vpop.f32.mrb[0].mxu0
    %v539 = vadd.f32 %v451, %v538
    %v540 = vpop.f32.mrb[0].mxu0
    %v541 = vadd.f32 %v455, %v540
    %542 = vmatprep.mubr.f32.mxu0 %v462
    %543 = vmatmul.mubr.f32.gmra.mrb[0].mxu0 %v344
    %v544 = vpop.f32.mrb[0].mxu0
    %v545 = vadd.f32 %v451, %v544
    %v546 = vpop.f32.mrb[0].mxu0
    %v547 = vadd.f32 %v455, %v546
    %548 = vmatprep.mubr.f32.mxu0 %v464
    %549 = vmatmul.mubr.f32.gmra.mrb[0].mxu0 %v345
    %v550 = vpop.f32.mrb[0].mxu0
    %v551 = vadd.f32 %v451, %v550
    %v552 = vpop.f32.mrb[0].mxu0
    %v553 = vadd.f32 %v455, %v552
    %554 = vdwg.mxu0
    %v555 = vtanh.pop %v533
    %v556 = vtanh.pop %v535
    %v557 = vtanh.pop %v539
    %v558 = vtanh.pop %v541
    %v559 = vtanh.pop %v545
    %v560 = vtanh.pop %v547
    %v561 = vtanh.pop %v551
    %v562 = vtanh.pop %v553
    %v564 = vsel %vm331, %v347, 0
    %v567 = vsel %vm331, %v349, 0
    %v570 = vsel %vm331, %v351, 0
    %v573 = vsel %vm331, %v353, 0
    %575 = vmatprep.subr.mxu0 %v407
    %576 = vmatpush1.msra.mxu0 %v406
    %577 = vmatprep.subr.mxu0 %v409
    %578 = vmatpush1.msra.mxu0 %v408
    %579 = vmatprep.subr.mxu0 %v411
    %580 = vmatpush1.msra.mxu0 %v410
    %581 = vmatprep.subr.mxu0 %v413
    %582 = vmatpush1.msra.mxu0 %v412
    %583 = vmatprep.subr.mxu0 %v415
    %584 = vmatpush1.msra.mxu0 %v414
    %585 = vmatprep.subr.mxu0 %v417
    %586 = vmatpush1.msra.mxu0 %v416
    %587 = vmatprep.subr.mxu0 %v419
    %588 = vmatpush1.msra.mxu0 %v418
    %589 = vmatprep.subr.mxu0 %v421
    %590 = vmatpush1.msra.mxu0 %v420
    %591 = vmatprep.subr.mxu0 %v423
    %592 = vmatpush1.msra.mxu0 %v422
    %593 = vmatprep.subr.mxu0 %v425
    %594 = vmatpush1.msra.mxu0 %v424
    %595 = vmatprep.subr.mxu0 %v427
    %596 = vmatpush1.msra.mxu0 %v426
    %597 = vmatprep.subr.mxu0 %v429
    %598 = vmatpush1.msra.mxu0 %v428
    %599 = vmatprep.subr.mxu0 %v431
    %600 = vmatpush1.msra.mxu0 %v430
    %601 = vmatprep.subr.mxu0 %v433
    %602 = vmatpush1.msra.mxu0 %v432
    %603 = vmatprep.subr.mxu0 %v435
    %604 = vmatpush1.msra.mxu0 %v434
    %605 = vmatprep.subr.mxu0 %v437
    %606 = vmatpush1.msra.mxu0 %v436
    %607 = vmatprep.subr.mxu0 %v439
    %608 = vmatpush1.msra.mxu0 %v438
    %609 = vmatprep.subr.mxu0 %v441
    %610 = vmatpush1.msra.mxu0 %v440
    %611 = vmatprep.subr.mxu0 %v443
    %612 = vmatpush1.msra.mxu0 %v442
    %613 = vmatprep.subr.mxu0 %v445
    %614 = vmatpush1.msra.mxu0 %v444
    %615 = vmatprep.subr.mxu0 0.0
    %616 = vmatpush1.msra.mxu0 0.0
    %617 = vmatprep.subr.mxu0 0.0
    %618 = vmatpush1.msra.mxu0 0.0
    %619 = vmatprep.subr.mxu0 0.0
    %620 = vmatpush1.msra.mxu0 0.0
    %621 = vmatprep.subr.mxu0 0.0
    %622 = vmatpush1.msra.mxu0 0.0
    %623 = vmatprep.subr.mxu0 0.0
    %624 = vmatpush1.msra.mxu0 0.0
    %625 = vmatprep.subr.mxu0 0.0
    %626 = vmatpush1.msra.mxu0 0.0
    %627 = vmatprep.subr.mxu0 0.0
    %628 = vmatpush1.msra.mxu0 0.0
    %629 = vmatprep.subr.mxu0 0.0
    %630 = vmatpush1.msra.mxu0 0.0
    %631 = vmatprep.subr.mxu0 0.0
    %632 = vmatpush1.msra.mxu0 0.0
    %633 = vmatprep.subr.mxu0 0.0
    %634 = vmatpush1.msra.mxu0 0.0
    %635 = vmatprep.subr.mxu0 0.0
    %636 = vmatpush1.msra.mxu0 0.0
    %637 = vmatprep.subr.mxu0 0.0
    %638 = vmatpush1.msra.mxu0 0.0
    %639 = vmatprep.mubr.f32.mxu0 %v564
    %640 = vmatmul.mubr.f32.gmra.mrb[0].mxu0 %v402
    %v641 = vpop.f32.mrb[0].mxu0
    %v642 = vadd.f32 %v451, %v641
    %v643 = vpop.f32.mrb[0].mxu0
    %v644 = vadd.f32 %v455, %v643
    %645 = vmatprep.mubr.f32.mxu0 %v567
    %646 = vmatmul.mubr.f32.gmra.mrb[0].mxu0 %v403
    %v647 = vpop.f32.mrb[0].mxu0
    %v648 = vadd.f32 %v451, %v647
    %v649 = vpop.f32.mrb[0].mxu0
    %v650 = vadd.f32 %v455, %v649
    %651 = vmatprep.mubr.f32.mxu0 %v570
    %652 = vmatmul.mubr.f32.gmra.mrb[0].mxu0 %v404
    %v653 = vpop.f32.mrb[0].mxu0
    %v654 = vadd.f32 %v451, %v653
    %v655 = vpop.f32.mrb[0].mxu0
    %v656 = vadd.f32 %v455, %v655
    %657 = vmatprep.mubr.f32.mxu0 %v573
    %658 = vmatmul.mubr.f32.gmra.mrb[0].mxu0 %v405
    %v659 = vpop.f32.mrb[0].mxu0
    %v660 = vadd.f32 %v451, %v659
    %v661 = vpop.f32.mrb[0].mxu0
    %v662 = vadd.f32 %v455, %v661
    %663 = vdwg.mxu0
    %v664 = vtanh.pop %v642
    %v665 = vtanh.pop %v644
    %v666 = vtanh.pop %v648
    %v667 = vtanh.pop %v650
    %v668 = vtanh.pop %v654
    %v669 = vtanh.pop %v656
    %v670 = vtanh.pop %v660
    %v671 = vtanh.pop %v662
    %v672 = vmax.f32 %v555, %v664
    %v673 = vmax.f32 %v556, %v665
    %v674 = vmax.f32 %v557, %v666
    %v675 = vmax.f32 %v558, %v667
    %v676 = vmax.f32 %v559, %v668
    %v677 = vmax.f32 %v560, %v669
    %v678 = vmax.f32 %v561, %v670
    %v679 = vmax.f32 %v562, %v671
    %v680 = vld [vmem:[#allocation10] sm:$0xff]
    %v681 = vld [vmem:[#allocation10 + $0x8] sm:$0xff]
    %v682 = vld [vmem:[#allocation10 + $0x10] sm:$0xff]
    %v683 = vld [vmem:[#allocation10 + $0x18] sm:$0xff]
    %v684 = vld [vmem:[#allocation10 + $0x20] sm:$0xff]
    %v685 = vld [vmem:[#allocation10 + $0x28] sm:$0xff]
    %v686 = vld [vmem:[#allocation10 + $0x30] sm:$0xff]
    %v687 = vld [vmem:[#allocation10 + $0x38] sm:$0xff]
    %v688 = vld [vmem:[#allocation10 + $0x40] sm:$0xff]
    %v689 = vld [vmem:[#allocation10 + $0x48] sm:$0xff]
    %v690 = vld [vmem:[#allocation10 + $0x50] sm:$0xff]
    %v691 = vld [vmem:[#allocation10 + $0x58] sm:$0xff]
    %v692 = vld [vmem:[#allocation10 + $0x60] sm:$0xff]
    %v693 = vld [vmem:[#allocation10 + $0x68] sm:$0xff]
    %v694 = vld [vmem:[#allocation10 + $0x70] sm:$0xff]
    %v695 = vld [vmem:[#allocation10 + $0x78] sm:$0xff]
    %v696 = vld [vmem:[#allocation10 + $0x80] sm:$0xff]
    %v697 = vld [vmem:[#allocation10 + $0x88] sm:$0xff]
    %v698 = vld [vmem:[#allocation10 + $0x90] sm:$0xff]
    %v699 = vld [vmem:[#allocation10 + $0x98] sm:$0xff]
    %v700 = vld [vmem:[#allocation10 + $0xa0] sm:$0xff]
    %vm701 = vcmask 326656
    %v703 = vsel %vm701, %v673, 0
    %v706 = vsel %vm701, %v675, 0
    %v709 = vsel %vm701, %v677, 0
    %v712 = vsel %vm701, %v679, 0
    %714 = vmatprep.subr.mxu0 0.0
    %715 = vmatpush1.msra.mxu0 %v680
    %716 = vmatprep.subr.mxu0 0.0
    %717 = vmatpush1.msra.mxu0 %v681
    %718 = vmatprep.subr.mxu0 0.0
    %719 = vmatpush1.msra.mxu0 %v682
    %720 = vmatprep.subr.mxu0 0.0
    %721 = vmatpush1.msra.mxu0 %v683
    %722 = vmatprep.subr.mxu0 0.0
    %723 = vmatpush1.msra.mxu0 %v684
    %724 = vmatprep.subr.mxu0 0.0
    %725 = vmatpush1.msra.mxu0 %v685
    %726 = vmatprep.subr.mxu0 0.0
    %727 = vmatpush1.msra.mxu0 %v686
    %728 = vmatprep.subr.mxu0 0.0
    %729 = vmatpush1.msra.mxu0 %v687
    %730 = vmatprep.subr.mxu0 0.0
    %731 = vmatpush1.msra.mxu0 %v688
    %732 = vmatprep.subr.mxu0 0.0
    %733 = vmatpush1.msra.mxu0 %v689
    %734 = vmatprep.subr.mxu0 0.0
    %735 = vmatpush1.msra.mxu0 %v690
    %736 = vmatprep.subr.mxu0 0.0
    %737 = vmatpush1.msra.mxu0 %v691
    %738 = vmatprep.subr.mxu0 0.0
    %739 = vmatpush1.msra.mxu0 %v692
    %740 = vmatprep.subr.mxu0 0.0
    %741 = vmatpush1.msra.mxu0 %v693
    %742 = vmatprep.subr.mxu0 0.0
    %743 = vmatpush1.msra.mxu0 %v694
    %744 = vmatprep.subr.mxu0 0.0
    %745 = vmatpush1.msra.mxu0 %v695
    %746 = vmatprep.subr.mxu0 0.0
    %747 = vmatpush1.msra.mxu0 %v696
    %748 = vmatprep.subr.mxu0 0.0
    %749 = vmatpush1.msra.mxu0 %v697
    %750 = vmatprep.subr.mxu0 0.0
    %751 = vmatpush1.msra.mxu0 %v698
    %752 = vmatprep.subr.mxu0 0.0
    %753 = vmatpush1.msra.mxu0 %v699
    %754 = vmatprep.subr.mxu0 0.0
    %755 = vmatpush1.msra.mxu0 %v700
    %756 = vmatprep.subr.mxu0 0.0
    %757 = vmatpush1.msra.mxu0 0.0
    %758 = vmatprep.subr.mxu0 0.0
    %759 = vmatpush1.msra.mxu0 0.0
    %760 = vmatprep.subr.mxu0 0.0
    %761 = vmatpush1.msra.mxu0 0.0
    %762 = vmatprep.subr.mxu0 0.0
    %763 = vmatpush1.msra.mxu0 0.0
    %764 = vmatprep.subr.mxu0 0.0
    %765 = vmatpush1.msra.mxu0 0.0
    %766 = vmatprep.subr.mxu0 0.0
    %767 = vmatpush1.msra.mxu0 0.0
    %768 = vmatprep.subr.mxu0 0.0
    %769 = vmatpush1.msra.mxu0 0.0
    %770 = vmatprep.subr.mxu0 0.0
    %771 = vmatpush1.msra.mxu0 0.0
    %772 = vmatprep.subr.mxu0 0.0
    %773 = vmatpush1.msra.mxu0 0.0
    %774 = vmatprep.subr.mxu0 0.0
    %775 = vmatpush1.msra.mxu0 0.0
    %776 = vmatprep.subr.mxu0 0.0
    %777 = vmatpush1.msra.mxu0 0.0
    %778 = vmatprep.mubr.f32.mxu0 %v703
    %779 = vmatmul.mubr.f32.gmra.mrb[0].mxu0 %v672
    %v780 = vpop.f32.mrb[0].mxu0
    %v781 = vadd.f32 0.0, %v780
    %v782 = vpop.f32.mrb[0].mxu0
    %783 = vmatprep.mubr.f32.mxu0 %v706
    %784 = vmatmul.mubr.f32.gmra.mrb[0].mxu0 %v674
    %v785 = vpop.f32.mrb[0].mxu0
    %v786 = vadd.f32 0.0, %v785
    %v787 = vpop.f32.mrb[0].mxu0
    %788 = vmatprep.mubr.f32.mxu0 %v709
    %789 = vmatmul.mubr.f32.gmra.mrb[0].mxu0 %v676
    %v790 = vpop.f32.mrb[0].mxu0
    %v791 = vadd.f32 0.0, %v790
    %v792 = vpop.f32.mrb[0].mxu0
    %793 = vmatprep.mubr.f32.mxu0 %v712
    %794 = vmatmul.mubr.f32.gmra.mrb[0].mxu0 %v678
    %v795 = vpop.f32.mrb[0].mxu0
    %v796 = vadd.f32 0.0, %v795
    %v797 = vpop.f32.mrb[0].mxu0
    %798 = vdwg.mxu0
    %v799 = vld [vmem:[#allocation12] sm:$0xff]
    %v800 = vld [vmem:[#allocation12 + $0x8] sm:$0xff]
    %v801 = vld [vmem:[#allocation12 + $0x10] sm:$0xff]
    %v802 = vld [vmem:[#allocation12 + $0x18] sm:$0xff]
    %v803 = vld [vmem:[#allocation12 + $0x20] sm:$0xff]
    %v804 = vld [vmem:[#allocation12 + $0x28] sm:$0xff]
    %v805 = vld [vmem:[#allocation12 + $0x30] sm:$0xff]
    %v806 = vld [vmem:[#allocation12 + $0x38] sm:$0xff]
    %v807 = vld [vmem:[#allocation12 + $0x40] sm:$0xff]
    %v808 = vld [vmem:[#allocation12 + $0x48] sm:$0xff]
    %v809 = vld [vmem:[#allocation12 + $0x50] sm:$0xff]
    %v810 = vld [vmem:[#allocation12 + $0x58] sm:$0xff]
    %v811 = vld [vmem:[#allocation12 + $0x60] sm:$0xff]
    %v812 = vld [vmem:[#allocation12 + $0x68] sm:$0xff]
    %v813 = vld [vmem:[#allocation12 + $0x70] sm:$0xff]
    %v814 = vld [vmem:[#allocation12 + $0x78] sm:$0xff]
    %v815 = vld [vmem:[#allocation12 + $0x80] sm:$0xff]
    %v816 = vld [vmem:[#allocation12 + $0x88] sm:$0xff]
    %v817 = vld [vmem:[#allocation12 + $0x90] sm:$0xff]
    %v818 = vld [vmem:[#allocation12 + $0x98] sm:$0xff]
    %v819 = vld [vmem:[#allocation12 + $0xa0] sm:$0xff]
    %820 = vmatprep.subr.mxu0 0.0
    %821 = vmatpush1.msra.mxu0 %v799
    %822 = vmatprep.subr.mxu0 0.0
    %823 = vmatpush1.msra.mxu0 %v800
    %824 = vmatprep.subr.mxu0 0.0
    %825 = vmatpush1.msra.mxu0 %v801
    %826 = vmatprep.subr.mxu0 0.0
    %827 = vmatpush1.msra.mxu0 %v802
    %828 = vmatprep.subr.mxu0 0.0
    %829 = vmatpush1.msra.mxu0 %v803
    %830 = vmatprep.subr.mxu0 0.0
    %831 = vmatpush1.msra.mxu0 %v804
    %832 = vmatprep.subr.mxu0 0.0
    %833 = vmatpush1.msra.mxu0 %v805
    %834 = vmatprep.subr.mxu0 0.0
    %835 = vmatpush1.msra.mxu0 %v806
    %836 = vmatprep.subr.mxu0 0.0
    %837 = vmatpush1.msra.mxu0 %v807
    %838 = vmatprep.subr.mxu0 0.0
    %839 = vmatpush1.msra.mxu0 %v808
    %840 = vmatprep.subr.mxu0 0.0
    %841 = vmatpush1.msra.mxu0 %v809
    %842 = vmatprep.subr.mxu0 0.0
    %843 = vmatpush1.msra.mxu0 %v810
    %844 = vmatprep.subr.mxu0 0.0
    %845 = vmatpush1.msra.mxu0 %v811
    %846 = vmatprep.subr.mxu0 0.0
    %847 = vmatpush1.msra.mxu0 %v812
    %848 = vmatprep.subr.mxu0 0.0
    %849 = vmatpush1.msra.mxu0 %v813
    %850 = vmatprep.subr.mxu0 0.0
    %851 = vmatpush1.msra.mxu0 %v814
    %852 = vmatprep.subr.mxu0 0.0
    %853 = vmatpush1.msra.mxu0 %v815
    %854 = vmatprep.subr.mxu0 0.0
    %855 = vmatpush1.msra.mxu0 %v816
    %856 = vmatprep.subr.mxu0 0.0
    %857 = vmatpush1.msra.mxu0 %v817
    %858 = vmatprep.subr.mxu0 0.0
    %859 = vmatpush1.msra.mxu0 %v818
    %860 = vmatprep.subr.mxu0 0.0
    %861 = vmatpush1.msra.mxu0 %v819
    %862 = vmatprep.subr.mxu0 0.0
    %863 = vmatpush1.msra.mxu0 0.0
    %864 = vmatprep.subr.mxu0 0.0
    %865 = vmatpush1.msra.mxu0 0.0
    %866 = vmatprep.subr.mxu0 0.0
    %867 = vmatpush1.msra.mxu0 0.0
    %868 = vmatprep.subr.mxu0 0.0
    %869 = vmatpush1.msra.mxu0 0.0
    %870 = vmatprep.subr.mxu0 0.0
    %871 = vmatpush1.msra.mxu0 0.0
    %872 = vmatprep.subr.mxu0 0.0
    %873 = vmatpush1.msra.mxu0 0.0
    %874 = vmatprep.subr.mxu0 0.0
    %875 = vmatpush1.msra.mxu0 0.0
    %876 = vmatprep.subr.mxu0 0.0
    %877 = vmatpush1.msra.mxu0 0.0
    %878 = vmatprep.subr.mxu0 0.0
    %879 = vmatpush1.msra.mxu0 0.0
    %880 = vmatprep.subr.mxu0 0.0
    %881 = vmatpush1.msra.mxu0 0.0
    %882 = vmatprep.subr.mxu0 0.0
    %883 = vmatpush1.msra.mxu0 0.0
    %884 = vmatprep.mubr.f32.mxu0 %v703
    %885 = vmatmul.mubr.f32.gmra.mrb[0].mxu0 %v672
    %v886 = vpop.f32.mrb[0].mxu0
    %v887 = vadd.f32 0.0, %v886
    %v888 = vpop.f32.mrb[0].mxu0
    %889 = vmatprep.mubr.f32.mxu0 %v706
    %890 = vmatmul.mubr.f32.gmra.mrb[0].mxu0 %v674
    %v891 = vpop.f32.mrb[0].mxu0
    %v892 = vadd.f32 0.0, %v891
    %v893 = vpop.f32.mrb[0].mxu0
    %894 = vmatprep.mubr.f32.mxu0 %v709
    %895 = vmatmul.mubr.f32.gmra.mrb[0].mxu0 %v676
    %v896 = vpop.f32.mrb[0].mxu0
    %v897 = vadd.f32 0.0, %v896
    %v898 = vpop.f32.mrb[0].mxu0
    %899 = vmatprep.mubr.f32.mxu0 %v712
    %900 = vmatmul.mubr.f32.gmra.mrb[0].mxu0 %v678
    %v901 = vpop.f32.mrb[0].mxu0
    %v902 = vadd.f32 0.0, %v901
    %v903 = vpop.f32.mrb[0].mxu0
    %904 = vdwg.mxu0
    %v905 = vmax.f32 %v781, %v887
    %v906 = vmax.f32 %v786, %v892
    %v907 = vmax.f32 %v791, %v897
    %v908 = vmax.f32 %v796, %v902
    %vm909 = vcmask 687104
    %910 = vst.msk [vmem:[#allocation2] sm:$0xff] %vm909, %v905
    %911 = vst.msk [vmem:[#allocation2 + $0x8] sm:$0xff] %vm909, %v906
    %912 = vst.msk [vmem:[#allocation2 + $0x10] sm:$0xff] %vm909, %v907
    %913 = vst.msk [vmem:[#allocation2 + $0x18] sm:$0xff] %vm909, %v908
    %914 = vst.msk [vmem:[#allocation2 + $0x20] sm:$0xff] %vm909, 0.0
    %v915 = vld [vmem:[#allocation2] ss:$2 sm:$0xff]
    %s916 = scalar_lea.vmem [#allocation2], 16
    %v917 = vld [vmem:[%s916] ss:$2 sm:$0xff]
    %s918 = scalar_lea.vmem [#allocation2], 1
    %v919 = vld [vmem:[%s918] ss:$2 sm:$0xff]
    %s920 = scalar_lea.vmem [#allocation2], 17
    %v921 = vld [vmem:[%s920] ss:$2 sm:$0xff]
    %s922 = scalar_lea.vmem [#allocation2], 2
    %v923 = vld [vmem:[%s922] ss:$2 sm:$0xff]
    %s924 = scalar_lea.vmem [#allocation2], 18
    %v925 = vld [vmem:[%s924] ss:$2 sm:$0xff]
    %s926 = scalar_lea.vmem [#allocation2], 3
    %v927 = vld [vmem:[%s926] ss:$2 sm:$0xff]
    %s928 = scalar_lea.vmem [#allocation2], 19
    %v929 = vld [vmem:[%s928] ss:$2 sm:$0xff]
    %s930 = scalar_lea.vmem [#allocation2], 4
    %v931 = vld [vmem:[%s930] ss:$2 sm:$0xff]
    %s932 = scalar_lea.vmem [#allocation2], 20
    %v933 = vld [vmem:[%s932] ss:$2 sm:$0xff]
    %936 = vrot.lane.b32.xlu0 %v919, 84
    %v937 = vpop.permute.xlu0 %936
    %938 = vrot.lane.b32.xlu0 %v921, 84
    %v939 = vpop.permute.xlu0 %938
    %944 = vrot.lane.b32.xlu0 %v923, 40
    %v945 = vpop.permute.xlu0 %944
    %946 = vrot.lane.b32.xlu0 %v925, 40
    %v947 = vpop.permute.xlu0 %946
    %952 = vrot.lane.b32.xlu0 %v927, 124
    %v953 = vpop.permute.xlu0 %952
    %954 = vrot.lane.b32.xlu0 %v929, 124
    %v955 = vpop.permute.xlu0 %954
    %960 = vrot.lane.b32.xlu0 %v931, 80
    %v961 = vpop.permute.xlu0 %960
    %962 = vrot.lane.b32.xlu0 %v933, 80
    %v963 = vpop.permute.xlu0 %962
    %v966 = vsel %vm909, %v915, %v937
    %v967 = vsel %vm909, %v917, %v939
    %v968 = vsel %vm701, %v937, %v945
    %v969 = vsel %vm701, %v939, %v947
    %vm970 = vcmask 1014784
    %v971 = vsel %vm970, %v968, %v953
    %v972 = vsel %vm970, %v969, %v955
    %vm973 = vcmask 654336
    %v974 = vsel %vm973, %v953, %v961
    %v975 = vsel %vm973, %v955, %v963
    %s976 = scalar_lea.vmem [#allocation2], 5
    %v977 = vld [vmem:[%s976] ss:$2 sm:$0xff]
    %s978 = scalar_lea.vmem [#allocation2], 21
    %v979 = vld [vmem:[%s978] ss:$2 sm:$0xff]
    %980 = vrot.lane.b32.xlu0 %v923, 84
    %v981 = vpop.permute.xlu0 %980
    %982 = vrot.lane.b32.xlu0 %v925, 84
    %v983 = vpop.permute.xlu0 %982
    %986 = vrot.lane.b32.xlu0 %v927, 40
    %v987 = vpop.permute.xlu0 %986
    %988 = vrot.lane.b32.xlu0 %v929, 40
    %v989 = vpop.permute.xlu0 %988
    %992 = vrot.lane.b32.xlu0 %v931, 124
    %v993 = vpop.permute.xlu0 %992
    %994 = vrot.lane.b32.xlu0 %v933, 124
    %v995 = vpop.permute.xlu0 %994
    %1000 = vrot.lane.b32.xlu0 %v977, 80
    %v1001 = vpop.permute.xlu0 %1000
    %1002 = vrot.lane.b32.xlu0 %v979, 80
    %v1003 = vpop.permute.xlu0 %1002
    %v1006 = vsel %vm909, %v919, %v981
    %v1007 = vsel %vm909, %v921, %v983
    %v1008 = vsel %vm701, %v981, %v987
    %v1009 = vsel %vm701, %v983, %v989
    %v1010 = vsel %vm970, %v1008, %v993
    %v1011 = vsel %vm970, %v1009, %v995
    %v1012 = vsel %vm973, %v993, %v1001
    %v1013 = vsel %vm973, %v995, %v1003
    %v1014 = vld [vmem:[#allocation13] sm:$0xff]
    %v1015 = vld [vmem:[#allocation13 + $0x8] sm:$0xff]
    %v1016 = vld [vmem:[#allocation13 + $0x10] sm:$0xff]
    %v1017 = vld [vmem:[#allocation13 + $0x18] sm:$0xff]
    %v1018 = vld [vmem:[#allocation13 + $0x20] sm:$0xff]
    %v1019 = vld [vmem:[#allocation13 + $0x28] sm:$0xff]
    %v1020 = vld [vmem:[#allocation13 + $0x30] sm:$0xff]
    %v1021 = vld [vmem:[#allocation13 + $0x38] sm:$0xff]
    %v1022 = vld [vmem:[#allocation13 + $0x40] sm:$0xff]
    %v1023 = vld [vmem:[#allocation13 + $0x48] sm:$0xff]
    %v1024 = vld [vmem:[#allocation13 + $0x50] sm:$0xff]
    %v1025 = vld [vmem:[#allocation13 + $0x58] sm:$0xff]
    %v1026 = vld [vmem:[#allocation13 + $0x60] sm:$0xff]
    %v1027 = vld [vmem:[#allocation13 + $0x68] sm:$0xff]
    %v1028 = vld [vmem:[#allocation13 + $0x70] sm:$0xff]
    %v1029 = vld [vmem:[#allocation13 + $0x78] sm:$0xff]
    %v1030 = vld [vmem:[#allocation13 + $0x80] sm:$0xff]
    %v1031 = vld [vmem:[#allocation13 + $0x88] sm:$0xff]
    %v1032 = vld [vmem:[#allocation13 + $0x90] sm:$0xff]
    %v1033 = vld [vmem:[#allocation13 + $0x98] sm:$0xff]
    %v1034 = vld [vmem:[#allocation13 + $0xa0] sm:$0xff]
    %v1035 = vld [vmem:[#allocation13 + $0xa8] sm:$0xff]
    %v1036 = vld [vmem:[#allocation13 + $0xb0] sm:$0xff]
    %v1037 = vld [vmem:[#allocation13 + $0xb8] sm:$0xff]
    %v1038 = vld [vmem:[#allocation13 + $0xc0] sm:$0xff]
    %v1039 = vld [vmem:[#allocation13 + $0xc8] sm:$0xff]
    %v1040 = vld [vmem:[#allocation13 + $0xd0] sm:$0xff]
    %v1041 = vld [vmem:[#allocation13 + $0xd8] sm:$0xff]
    %v1042 = vld [vmem:[#allocation13 + $0xe0] sm:$0xff]
    %v1043 = vld [vmem:[#allocation13 + $0xe8] sm:$0xff]
    %v1044 = vld [vmem:[#allocation13 + $0xf0] sm:$0xff]
    %v1045 = vld [vmem:[#allocation13 + $0xf8] sm:$0xff]
    %v1046 = vld [vmem:[#allocation13 + $0x100] sm:$0xff]
    %v1047 = vld [vmem:[#allocation13 + $0x108] sm:$0xff]
    %v1048 = vld [vmem:[#allocation13 + $0x110] sm:$0xff]
    %v1049 = vld [vmem:[#allocation13 + $0x118] sm:$0xff]
    %v1050 = vld [vmem:[#allocation13 + $0x120] sm:$0xff]
    %v1051 = vld [vmem:[#allocation13 + $0x128] sm:$0xff]
    %v1052 = vld [vmem:[#allocation13 + $0x130] sm:$0xff]
    %v1053 = vld [vmem:[#allocation13 + $0x138] sm:$0xff]
    %v1054 = vld [vmem:[#allocation13 + $0x140] sm:$0xff]
    %v1055 = vld [vmem:[#allocation13 + $0x148] sm:$0xff]
    %v1056 = vld [vmem:[#allocation13 + $0x150] sm:$0xff]
    %v1057 = vld [vmem:[#allocation13 + $0x158] sm:$0xff]
    %v1058 = vld [vmem:[#allocation13 + $0x160] sm:$0xff]
    %v1059 = vld [vmem:[#allocation13 + $0x168] sm:$0xff]
    %v1060 = vld [vmem:[#allocation13 + $0x170] sm:$0xff]
    %v1061 = vld [vmem:[#allocation13 + $0x178] sm:$0xff]
    %v1062 = vld [vmem:[#allocation13 + $0x180] sm:$0xff]
    %v1063 = vld [vmem:[#allocation13 + $0x188] sm:$0xff]
    %v1064 = vld [vmem:[#allocation13 + $0x190] sm:$0xff]
    %v1065 = vld [vmem:[#allocation13 + $0x198] sm:$0xff]
    %v1066 = vld [vmem:[#allocation13 + $0x1a0] sm:$0xff]
    %v1067 = vld [vmem:[#allocation13 + $0x1a8] sm:$0xff]
    %v1068 = vld [vmem:[#allocation13 + $0x1b0] sm:$0xff]
    %v1069 = vld [vmem:[#allocation13 + $0x1b8] sm:$0xff]
    %v1070 = vld [vmem:[#allocation13 + $0x1c0] sm:$0xff]
    %v1071 = vld [vmem:[#allocation13 + $0x1c8] sm:$0xff]
    %v1072 = vld [vmem:[#allocation13 + $0x1d0] sm:$0xff]
    %v1073 = vld [vmem:[#allocation13 + $0x1d8] sm:$0xff]
    %v1074 = vld [vmem:[#allocation13 + $0x1e0] sm:$0xff]
    %v1075 = vld [vmem:[#allocation13 + $0x1e8] sm:$0xff]
    %v1076 = vld [vmem:[#allocation13 + $0x1f0] sm:$0xff]
    %v1077 = vld [vmem:[#allocation13 + $0x1f8] sm:$0xff]
    %v1078 = vld [vmem:[#allocation13 + $0x200] sm:$0xff]
    %v1079 = vld [vmem:[#allocation13 + $0x208] sm:$0xff]
    %v1080 = vld [vmem:[#allocation13 + $0x210] sm:$0xff]
    %v1081 = vld [vmem:[#allocation13 + $0x218] sm:$0xff]
    %v1082 = vld [vmem:[#allocation13 + $0x220] sm:$0xff]
    %v1083 = vld [vmem:[#allocation13 + $0x228] sm:$0xff]
    %v1084 = vld [vmem:[#allocation13 + $0x230] sm:$0xff]
    %v1085 = vld [vmem:[#allocation13 + $0x238] sm:$0xff]
    %v1086 = vld [vmem:[#allocation13 + $0x240] sm:$0xff]
    %v1087 = vld [vmem:[#allocation13 + $0x248] sm:$0xff]
    %v1088 = vld [vmem:[#allocation13 + $0x250] sm:$0xff]
    %v1089 = vld [vmem:[#allocation13 + $0x258] sm:$0xff]
    %v1090 = vld [vmem:[#allocation13 + $0x260] sm:$0xff]
    %v1091 = vld [vmem:[#allocation13 + $0x268] sm:$0xff]
    %v1092 = vld [vmem:[#allocation13 + $0x270] sm:$0xff]
    %v1093 = vld [vmem:[#allocation13 + $0x278] sm:$0xff]
    %v1094 = vld [vmem:[#allocation13 + $0x280] sm:$0xff]
    %v1095 = vld [vmem:[#allocation13 + $0x288] sm:$0xff]
    %v1096 = vld [vmem:[#allocation13 + $0x290] sm:$0xff]
    %v1097 = vld [vmem:[#allocation13 + $0x298] sm:$0xff]
    %v1098 = vld [vmem:[#allocation13 + $0x2a0] sm:$0xff]
    %v1099 = vld [vmem:[#allocation13 + $0x2a8] sm:$0xff]
    %v1100 = vld [vmem:[#allocation13 + $0x2b0] sm:$0xff]
    %v1101 = vld [vmem:[#allocation13 + $0x2b8] sm:$0xff]
    %v1102 = vld [vmem:[#allocation13 + $0x2c0] sm:$0xff]
    %v1103 = vld [vmem:[#allocation13 + $0x2c8] sm:$0xff]
    %v1104 = vld [vmem:[#allocation13 + $0x2d0] sm:$0xff]
    %v1105 = vld [vmem:[#allocation13 + $0x2d8] sm:$0xff]
    %v1106 = vld [vmem:[#allocation13 + $0x2e0] sm:$0xff]
    %v1107 = vld [vmem:[#allocation13 + $0x2e8] sm:$0xff]
    %v1108 = vld [vmem:[#allocation13 + $0x2f0] sm:$0xff]
    %v1109 = vld [vmem:[#allocation13 + $0x2f8] sm:$0xff]
    %v1110 = vld [vmem:[#allocation13 + $0x300] sm:$0xff]
    %v1111 = vld [vmem:[#allocation13 + $0x308] sm:$0xff]
    %v1112 = vld [vmem:[#allocation13 + $0x310] sm:$0xff]
    %v1113 = vld [vmem:[#allocation13 + $0x318] sm:$0xff]
    %v1114 = vld [vmem:[#allocation13 + $0x320] sm:$0xff]
    %v1115 = vld [vmem:[#allocation13 + $0x328] sm:$0xff]
    %v1116 = vld [vmem:[#allocation13 + $0x330] sm:$0xff]
    %v1117 = vld [vmem:[#allocation13 + $0x338] sm:$0xff]
    %v1118 = vld [vmem:[#allocation13 + $0x340] sm:$0xf]
    %v1119 = vld [vmem:[#allocation13 + $0x348] sm:$0xf]
    %v1120 = vld [vmem:[#allocation15] sm:$0x3]
    %v1122 = vlaneseq
    %v1123 = vshrl.u32 %v1122, 7
    %v1124 = vsub.s32 0, %v1123
    %v1125 = vrot.slane %v1120, %v1124
    %v1126 = vlaneseq
    %v1127 = vshrl.u32 %v1126, 7
    %v1128 = vsub.s32 1, %v1127
    %v1129 = vrot.slane %v1120, %v1128
    %vm1132 = vcmask 293888
    %v1133 = vsel %vm1132, %v961, 0
    %v1135 = vsel %vm1132, %v963, 0
    %vm1137 = vcmask 1043456
    %v1139 = vsel %vm1137, %v1118, 0
    %v1142 = vsel %vm1137, %v1119, 0
    %1144 = vmatprep.subr.mxu0 %v1015
    %1145 = vmatpush1.msra.mxu0 %v1014
    %1146 = vmatprep.subr.mxu0 %v1017
    %1147 = vmatpush1.msra.mxu0 %v1016
    %1148 = vmatprep.subr.mxu0 %v1019
    %1149 = vmatpush1.msra.mxu0 %v1018
    %1150 = vmatprep.subr.mxu0 %v1021
    %1151 = vmatpush1.msra.mxu0 %v1020
    %1152 = vmatprep.subr.mxu0 %v1023
    %1153 = vmatpush1.msra.mxu0 %v1022
    %1154 = vmatprep.subr.mxu0 %v1025
    %1155 = vmatpush1.msra.mxu0 %v1024
    %1156 = vmatprep.subr.mxu0 %v1027
    %1157 = vmatpush1.msra.mxu0 %v1026
    %1158 = vmatprep.subr.mxu0 %v1029
    %1159 = vmatpush1.msra.mxu0 %v1028
    %1160 = vmatprep.subr.mxu0 %v1031
    %1161 = vmatpush1.msra.mxu0 %v1030
    %1162 = vmatprep.subr.mxu0 %v1033
    %1163 = vmatpush1.msra.mxu0 %v1032
    %1164 = vmatprep.subr.mxu0 %v1035
    %1165 = vmatpush1.msra.mxu0 %v1034
    %1166 = vmatprep.subr.mxu0 %v1037
    %1167 = vmatpush1.msra.mxu0 %v1036
    %1168 = vmatprep.subr.mxu0 %v1039
    %1169 = vmatpush1.msra.mxu0 %v1038
    %1170 = vmatprep.subr.mxu0 %v1041
    %1171 = vmatpush1.msra.mxu0 %v1040
    %1172 = vmatprep.subr.mxu0 %v1043
    %1173 = vmatpush1.msra.mxu0 %v1042
    %1174 = vmatprep.subr.mxu0 %v1045
    %1175 = vmatpush1.msra.mxu0 %v1044
    %1176 = vmatprep.subr.mxu0 %v1047
    %1177 = vmatpush1.msra.mxu0 %v1046
    %1178 = vmatprep.subr.mxu0 %v1049
    %1179 = vmatpush1.msra.mxu0 %v1048
    %1180 = vmatprep.subr.mxu0 %v1051
    %1181 = vmatpush1.msra.mxu0 %v1050
    %1182 = vmatprep.subr.mxu0 %v1053
    %1183 = vmatpush1.msra.mxu0 %v1052
    %1184 = vmatprep.subr.mxu0 %v1055
    %1185 = vmatpush1.msra.mxu0 %v1054
    %1186 = vmatprep.subr.mxu0 %v1057
    %1187 = vmatpush1.msra.mxu0 %v1056
    %1188 = vmatprep.subr.mxu0 %v1059
    %1189 = vmatpush1.msra.mxu0 %v1058
    %1190 = vmatprep.subr.mxu0 %v1061
    %1191 = vmatpush1.msra.mxu0 %v1060
    %1192 = vmatprep.subr.mxu0 %v1063
    %1193 = vmatpush1.msra.mxu0 %v1062
    %1194 = vmatprep.subr.mxu0 %v1065
    %1195 = vmatpush1.msra.mxu0 %v1064
    %1196 = vmatprep.subr.mxu0 %v1067
    %1197 = vmatpush1.msra.mxu0 %v1066
    %1198 = vmatprep.subr.mxu0 %v1069
    %1199 = vmatpush1.msra.mxu0 %v1068
    %1200 = vmatprep.subr.mxu0 %v1071
    %1201 = vmatpush1.msra.mxu0 %v1070
    %1202 = vmatprep.subr.mxu0 %v1073
    %1203 = vmatpush1.msra.mxu0 %v1072
    %1204 = vmatprep.subr.mxu0 %v1075
    %1205 = vmatpush1.msra.mxu0 %v1074
    %1206 = vmatprep.subr.mxu0 %v1077
    %1207 = vmatpush1.msra.mxu0 %v1076
    %1208 = vmatprep.mubr.f32.mxu0 %v971
    %1209 = vmatmul.mubr.f32.gmra.mrb[0].mxu0 %v966
    %v1210 = vpop.f32.mrb[0].mxu0
    %v1211 = vadd.f32 %v1125, %v1210
    %v1212 = vpop.f32.mrb[0].mxu0
    %v1213 = vadd.f32 %v1129, %v1212
    %1214 = vmatprep.mubr.f32.mxu0 %v972
    %1215 = vmatmul.mubr.f32.gmra.mrb[0].mxu0 %v967
    %v1216 = vpop.f32.mrb[0].mxu0
    %v1217 = vadd.f32 %v1125, %v1216
    %v1218 = vpop.f32.mrb[0].mxu0
    %v1219 = vadd.f32 %v1129, %v1218
    %1220 = vdwg.mxu0
    %1221 = vmatprep.subr.mxu0 %v1079
    %1222 = vmatpush1.msra.mxu0 %v1078
    %1223 = vmatprep.subr.mxu0 %v1081
    %1224 = vmatpush1.msra.mxu0 %v1080
    %1225 = vmatprep.subr.mxu0 %v1083
    %1226 = vmatpush1.msra.mxu0 %v1082
    %1227 = vmatprep.subr.mxu0 %v1085
    %1228 = vmatpush1.msra.mxu0 %v1084
    %1229 = vmatprep.subr.mxu0 %v1087
    %1230 = vmatpush1.msra.mxu0 %v1086
    %1231 = vmatprep.subr.mxu0 %v1089
    %1232 = vmatpush1.msra.mxu0 %v1088
    %1233 = vmatprep.subr.mxu0 %v1091
    %1234 = vmatpush1.msra.mxu0 %v1090
    %1235 = vmatprep.subr.mxu0 %v1093
    %1236 = vmatpush1.msra.mxu0 %v1092
    %1237 = vmatprep.subr.mxu0 %v1095
    %1238 = vmatpush1.msra.mxu0 %v1094
    %1239 = vmatprep.subr.mxu0 %v1097
    %1240 = vmatpush1.msra.mxu0 %v1096
    %1241 = vmatprep.subr.mxu0 %v1099
    %1242 = vmatpush1.msra.mxu0 %v1098
    %1243 = vmatprep.subr.mxu0 %v1101
    %1244 = vmatpush1.msra.mxu0 %v1100
    %1245 = vmatprep.subr.mxu0 %v1103
    %1246 = vmatpush1.msra.mxu0 %v1102
    %1247 = vmatprep.subr.mxu0 %v1105
    %1248 = vmatpush1.msra.mxu0 %v1104
    %1249 = vmatprep.subr.mxu0 %v1107
    %1250 = vmatpush1.msra.mxu0 %v1106
    %1251 = vmatprep.subr.mxu0 %v1109
    %1252 = vmatpush1.msra.mxu0 %v1108
    %1253 = vmatprep.subr.mxu0 %v1111
    %1254 = vmatpush1.msra.mxu0 %v1110
    %1255 = vmatprep.subr.mxu0 %v1113
    %1256 = vmatpush1.msra.mxu0 %v1112
    %1257 = vmatprep.subr.mxu0 %v1115
    %1258 = vmatpush1.msra.mxu0 %v1114
    %1259 = vmatprep.subr.mxu0 %v1117
    %1260 = vmatpush1.msra.mxu0 %v1116
    %1261 = vmatprep.subr.mxu0 %v1142
    %1262 = vmatpush1.msra.mxu0 %v1139
    %1263 = vmatprep.subr.mxu0 0.0
    %1264 = vmatpush1.msra.mxu0 0.0
    %1265 = vmatprep.subr.mxu0 0.0
    %1266 = vmatpush1.msra.mxu0 0.0
    %1267 = vmatprep.subr.mxu0 0.0
    %1268 = vmatpush1.msra.mxu0 0.0
    %1269 = vmatprep.subr.mxu0 0.0
    %1270 = vmatpush1.msra.mxu0 0.0
    %1271 = vmatprep.subr.mxu0 0.0
    %1272 = vmatpush1.msra.mxu0 0.0
    %1273 = vmatprep.subr.mxu0 0.0
    %1274 = vmatpush1.msra.mxu0 0.0
    %1275 = vmatprep.subr.mxu0 0.0
    %1276 = vmatpush1.msra.mxu0 0.0
    %1277 = vmatprep.subr.mxu0 0.0
    %1278 = vmatpush1.msra.mxu0 0.0
    %1279 = vmatprep.subr.mxu0 0.0
    %1280 = vmatpush1.msra.mxu0 0.0
    %1281 = vmatprep.subr.mxu0 0.0
    %1282 = vmatpush1.msra.mxu0 0.0
    %1283 = vmatprep.subr.mxu0 0.0
    %1284 = vmatpush1.msra.mxu0 0.0
    %1285 = vmatprep.mubr.f32.mxu0 %v1133
    %1286 = vmatmul.mubr.f32.gmra.mrb[0].mxu0 %v974
    %v1287 = vpop.f32.mrb[0].mxu0
    %v1288 = vadd.f32 %v1211, %v1287
    %v1289 = vpop.f32.mrb[0].mxu0
    %v1290 = vadd.f32 %v1213, %v1289
    %1291 = vmatprep.mubr.f32.mxu0 %v1135
    %1292 = vmatmul.mubr.f32.gmra.mrb[0].mxu0 %v975
    %v1293 = vpop.f32.mrb[0].mxu0
    %v1294 = vadd.f32 %v1217, %v1293
    %v1295 = vpop.f32.mrb[0].mxu0
    %v1296 = vadd.f32 %v1219, %v1295
    %1297 = vdwg.mxu0
    %v1298 = vtanh.pop %v1288
    %v1299 = vtanh.pop %v1290
    %v1300 = vtanh.pop %v1294
    %v1301 = vtanh.pop %v1296
    %v1302 = vsel %vm1132, %v1001, 0
    %v1304 = vsel %vm1132, %v1003, 0
    %1306 = vmatprep.subr.mxu0 %v1015
    %1307 = vmatpush1.msra.mxu0 %v1014
    %1308 = vmatprep.subr.mxu0 %v1017
    %1309 = vmatpush1.msra.mxu0 %v1016
    %1310 = vmatprep.subr.mxu0 %v1019
    %1311 = vmatpush1.msra.mxu0 %v1018
    %1312 = vmatprep.subr.mxu0 %v1021
    %1313 = vmatpush1.msra.mxu0 %v1020
    %1314 = vmatprep.subr.mxu0 %v1023
    %1315 = vmatpush1.msra.mxu0 %v1022
    %1316 = vmatprep.subr.mxu0 %v1025
    %1317 = vmatpush1.msra.mxu0 %v1024
    %1318 = vmatprep.subr.mxu0 %v1027
    %1319 = vmatpush1.msra.mxu0 %v1026
    %1320 = vmatprep.subr.mxu0 %v1029
    %1321 = vmatpush1.msra.mxu0 %v1028
    %1322 = vmatprep.subr.mxu0 %v1031
    %1323 = vmatpush1.msra.mxu0 %v1030
    %1324 = vmatprep.subr.mxu0 %v1033
    %1325 = vmatpush1.msra.mxu0 %v1032
    %1326 = vmatprep.subr.mxu0 %v1035
    %1327 = vmatpush1.msra.mxu0 %v1034
    %1328 = vmatprep.subr.mxu0 %v1037
    %1329 = vmatpush1.msra.mxu0 %v1036
    %1330 = vmatprep.subr.mxu0 %v1039
    %1331 = vmatpush1.msra.mxu0 %v1038
    %1332 = vmatprep.subr.mxu0 %v1041
    %1333 = vmatpush1.msra.mxu0 %v1040
    %1334 = vmatprep.subr.mxu0 %v1043
    %1335 = vmatpush1.msra.mxu0 %v1042
    %1336 = vmatprep.subr.mxu0 %v1045
    %1337 = vmatpush1.msra.mxu0 %v1044
    %1338 = vmatprep.subr.mxu0 %v1047
    %1339 = vmatpush1.msra.mxu0 %v1046
    %1340 = vmatprep.subr.mxu0 %v1049
    %1341 = vmatpush1.msra.mxu0 %v1048
    %1342 = vmatprep.subr.mxu0 %v1051
    %1343 = vmatpush1.msra.mxu0 %v1050
    %1344 = vmatprep.subr.mxu0 %v1053
    %1345 = vmatpush1.msra.mxu0 %v1052
    %1346 = vmatprep.subr.mxu0 %v1055
    %1347 = vmatpush1.msra.mxu0 %v1054
    %1348 = vmatprep.subr.mxu0 %v1057
    %1349 = vmatpush1.msra.mxu0 %v1056
    %1350 = vmatprep.subr.mxu0 %v1059
    %1351 = vmatpush1.msra.mxu0 %v1058
    %1352 = vmatprep.subr.mxu0 %v1061
    %1353 = vmatpush1.msra.mxu0 %v1060
    %1354 = vmatprep.subr.mxu0 %v1063
    %1355 = vmatpush1.msra.mxu0 %v1062
    %1356 = vmatprep.subr.mxu0 %v1065
    %1357 = vmatpush1.msra.mxu0 %v1064
    %1358 = vmatprep.subr.mxu0 %v1067
    %1359 = vmatpush1.msra.mxu0 %v1066
    %1360 = vmatprep.subr.mxu0 %v1069
    %1361 = vmatpush1.msra.mxu0 %v1068
    %1362 = vmatprep.subr.mxu0 %v1071
    %1363 = vmatpush1.msra.mxu0 %v1070
    %1364 = vmatprep.subr.mxu0 %v1073
    %1365 = vmatpush1.msra.mxu0 %v1072
    %1366 = vmatprep.subr.mxu0 %v1075
    %1367 = vmatpush1.msra.mxu0 %v1074
    %1368 = vmatprep.subr.mxu0 %v1077
    %1369 = vmatpush1.msra.mxu0 %v1076
    %1370 = vmatprep.mubr.f32.mxu0 %v1010
    %1371 = vmatmul.mubr.f32.gmra.mrb[0].mxu0 %v1006
    %v1372 = vpop.f32.mrb[0].mxu0
    %v1373 = vadd.f32 %v1125, %v1372
    %v1374 = vpop.f32.mrb[0].mxu0
    %v1375 = vadd.f32 %v1129, %v1374
    %1376 = vmatprep.mubr.f32.mxu0 %v1011
    %1377 = vmatmul.mubr.f32.gmra.mrb[0].mxu0 %v1007
    %v1378 = vpop.f32.mrb[0].mxu0
    %v1379 = vadd.f32 %v1125, %v1378
    %v1380 = vpop.f32.mrb[0].mxu0
    %v1381 = vadd.f32 %v1129, %v1380
    %1382 = vdwg.mxu0
    %1383 = vmatprep.subr.mxu0 %v1079
    %1384 = vmatpush1.msra.mxu0 %v1078
    %1385 = vmatprep.subr.mxu0 %v1081
    %1386 = vmatpush1.msra.mxu0 %v1080
    %1387 = vmatprep.subr.mxu0 %v1083
    %1388 = vmatpush1.msra.mxu0 %v1082
    %1389 = vmatprep.subr.mxu0 %v1085
    %1390 = vmatpush1.msra.mxu0 %v1084
    %1391 = vmatprep.subr.mxu0 %v1087
    %1392 = vmatpush1.msra.mxu0 %v1086
    %1393 = vmatprep.subr.mxu0 %v1089
    %1394 = vmatpush1.msra.mxu0 %v1088
    %1395 = vmatprep.subr.mxu0 %v1091
    %1396 = vmatpush1.msra.mxu0 %v1090
    %1397 = vmatprep.subr.mxu0 %v1093
    %1398 = vmatpush1.msra.mxu0 %v1092
    %1399 = vmatprep.subr.mxu0 %v1095
    %1400 = vmatpush1.msra.mxu0 %v1094
    %1401 = vmatprep.subr.mxu0 %v1097
    %1402 = vmatpush1.msra.mxu0 %v1096
    %1403 = vmatprep.subr.mxu0 %v1099
    %1404 = vmatpush1.msra.mxu0 %v1098
    %1405 = vmatprep.subr.mxu0 %v1101
    %1406 = vmatpush1.msra.mxu0 %v1100
    %1407 = vmatprep.subr.mxu0 %v1103
    %1408 = vmatpush1.msra.mxu0 %v1102
    %1409 = vmatprep.subr.mxu0 %v1105
    %1410 = vmatpush1.msra.mxu0 %v1104
    %1411 = vmatprep.subr.mxu0 %v1107
    %1412 = vmatpush1.msra.mxu0 %v1106
    %1413 = vmatprep.subr.mxu0 %v1109
    %1414 = vmatpush1.msra.mxu0 %v1108
    %1415 = vmatprep.subr.mxu0 %v1111
    %1416 = vmatpush1.msra.mxu0 %v1110
    %1417 = vmatprep.subr.mxu0 %v1113
    %1418 = vmatpush1.msra.mxu0 %v1112
    %1419 = vmatprep.subr.mxu0 %v1115
    %1420 = vmatpush1.msra.mxu0 %v1114
    %1421 = vmatprep.subr.mxu0 %v1117
    %1422 = vmatpush1.msra.mxu0 %v1116
    %1423 = vmatprep.subr.mxu0 %v1142
    %1424 = vmatpush1.msra.mxu0 %v1139
    %1425 = vmatprep.subr.mxu0 0.0
    %1426 = vmatpush1.msra.mxu0 0.0
    %1427 = vmatprep.subr.mxu0 0.0
    %1428 = vmatpush1.msra.mxu0 0.0
    %1429 = vmatprep.subr.mxu0 0.0
    %1430 = vmatpush1.msra.mxu0 0.0
    %1431 = vmatprep.subr.mxu0 0.0
    %1432 = vmatpush1.msra.mxu0 0.0
    %1433 = vmatprep.subr.mxu0 0.0
    %1434 = vmatpush1.msra.mxu0 0.0
    %1435 = vmatprep.subr.mxu0 0.0
    %1436 = vmatpush1.msra.mxu0 0.0
    %1437 = vmatprep.subr.mxu0 0.0
    %1438 = vmatpush1.msra.mxu0 0.0
    %1439 = vmatprep.subr.mxu0 0.0
    %1440 = vmatpush1.msra.mxu0 0.0
    %1441 = vmatprep.subr.mxu0 0.0
    %1442 = vmatpush1.msra.mxu0 0.0
    %1443 = vmatprep.subr.mxu0 0.0
    %1444 = vmatpush1.msra.mxu0 0.0
    %1445 = vmatprep.subr.mxu0 0.0
    %1446 = vmatpush1.msra.mxu0 0.0
    %1447 = vmatprep.mubr.f32.mxu0 %v1302
    %1448 = vmatmul.mubr.f32.gmra.mrb[0].mxu0 %v1012
    %v1449 = vpop.f32.mrb[0].mxu0
    %v1450 = vadd.f32 %v1373, %v1449
    %v1451 = vpop.f32.mrb[0].mxu0
    %v1452 = vadd.f32 %v1375, %v1451
    %1453 = vmatprep.mubr.f32.mxu0 %v1304
    %1454 = vmatmul.mubr.f32.gmra.mrb[0].mxu0 %v1013
    %v1455 = vpop.f32.mrb[0].mxu0
    %v1456 = vadd.f32 %v1379, %v1455
    %v1457 = vpop.f32.mrb[0].mxu0
    %v1458 = vadd.f32 %v1381, %v1457
    %1459 = vdwg.mxu0
    %v1460 = vtanh.pop %v1450
    %v1461 = vtanh.pop %v1452
    %v1462 = vtanh.pop %v1456
    %v1463 = vtanh.pop %v1458
    %v1464 = vmax.f32 %v1298, %v1460
    %v1465 = vmax.f32 %v1299, %v1461
    %v1466 = vmax.f32 %v1300, %v1462
    %v1467 = vmax.f32 %v1301, %v1463
    %v1468 = vld [vmem:[#allocation16] sm:$0xff]
    %v1469 = vld [vmem:[#allocation16 + $0x8] sm:$0xff]
    %v1470 = vld [vmem:[#allocation16 + $0x10] sm:$0xff]
    %v1471 = vld [vmem:[#allocation16 + $0x18] sm:$0xff]
    %v1472 = vld [vmem:[#allocation16 + $0x20] sm:$0xff]
    %v1473 = vld [vmem:[#allocation16 + $0x28] sm:$0xff]
    %v1474 = vld [vmem:[#allocation16 + $0x30] sm:$0xff]
    %v1475 = vld [vmem:[#allocation16 + $0x38] sm:$0xff]
    %v1476 = vld [vmem:[#allocation16 + $0x40] sm:$0xff]
    %v1477 = vld [vmem:[#allocation16 + $0x48] sm:$0xff]
    %v1478 = vld [vmem:[#allocation16 + $0x50] sm:$0xff]
    %v1479 = vld [vmem:[#allocation16 + $0x58] sm:$0xff]
    %v1480 = vld [vmem:[#allocation16 + $0x60] sm:$0xff]
    %v1481 = vld [vmem:[#allocation16 + $0x68] sm:$0xff]
    %v1482 = vld [vmem:[#allocation16 + $0x70] sm:$0xff]
    %v1483 = vld [vmem:[#allocation16 + $0x78] sm:$0xff]
    %v1484 = vld [vmem:[#allocation16 + $0x80] sm:$0xff]
    %v1485 = vld [vmem:[#allocation16 + $0x88] sm:$0xff]
    %v1486 = vld [vmem:[#allocation16 + $0x90] sm:$0xff]
    %v1487 = vld [vmem:[#allocation16 + $0x98] sm:$0xff]
    %v1489 = vsel %vm331, %v1465, 0
    %v1492 = vsel %vm331, %v1467, 0
    %1494 = vmatprep.subr.mxu0 0.0
    %1495 = vmatpush1.msra.mxu0 %v1468
    %1496 = vmatprep.subr.mxu0 0.0
    %1497 = vmatpush1.msra.mxu0 %v1469
    %1498 = vmatprep.subr.mxu0 0.0
    %1499 = vmatpush1.msra.mxu0 %v1470
    %1500 = vmatprep.subr.mxu0 0.0
    %1501 = vmatpush1.msra.mxu0 %v1471
    %1502 = vmatprep.subr.mxu0 0.0
    %1503 = vmatpush1.msra.mxu0 %v1472
    %1504 = vmatprep.subr.mxu0 0.0
    %1505 = vmatpush1.msra.mxu0 %v1473
    %1506 = vmatprep.subr.mxu0 0.0
    %1507 = vmatpush1.msra.mxu0 %v1474
    %1508 = vmatprep.subr.mxu0 0.0
    %1509 = vmatpush1.msra.mxu0 %v1475
    %1510 = vmatprep.subr.mxu0 0.0
    %1511 = vmatpush1.msra.mxu0 %v1476
    %1512 = vmatprep.subr.mxu0 0.0
    %1513 = vmatpush1.msra.mxu0 %v1477
    %1514 = vmatprep.subr.mxu0 0.0
    %1515 = vmatpush1.msra.mxu0 %v1478
    %1516 = vmatprep.subr.mxu0 0.0
    %1517 = vmatpush1.msra.mxu0 %v1479
    %1518 = vmatprep.subr.mxu0 0.0
    %1519 = vmatpush1.msra.mxu0 %v1480
    %1520 = vmatprep.subr.mxu0 0.0
    %1521 = vmatpush1.msra.mxu0 %v1481
    %1522 = vmatprep.subr.mxu0 0.0
    %1523 = vmatpush1.msra.mxu0 %v1482
    %1524 = vmatprep.subr.mxu0 0.0
    %1525 = vmatpush1.msra.mxu0 %v1483
    %1526 = vmatprep.subr.mxu0 0.0
    %1527 = vmatpush1.msra.mxu0 %v1484
    %1528 = vmatprep.subr.mxu0 0.0
    %1529 = vmatpush1.msra.mxu0 %v1485
    %1530 = vmatprep.subr.mxu0 0.0
    %1531 = vmatpush1.msra.mxu0 %v1486
    %1532 = vmatprep.subr.mxu0 0.0
    %1533 = vmatpush1.msra.mxu0 %v1487
    %1534 = vmatprep.subr.mxu0 0.0
    %1535 = vmatpush1.msra.mxu0 0.0
    %1536 = vmatprep.subr.mxu0 0.0
    %1537 = vmatpush1.msra.mxu0 0.0
    %1538 = vmatprep.subr.mxu0 0.0
    %1539 = vmatpush1.msra.mxu0 0.0
    %1540 = vmatprep.subr.mxu0 0.0
    %1541 = vmatpush1.msra.mxu0 0.0
    %1542 = vmatprep.subr.mxu0 0.0
    %1543 = vmatpush1.msra.mxu0 0.0
    %1544 = vmatprep.subr.mxu0 0.0
    %1545 = vmatpush1.msra.mxu0 0.0
    %1546 = vmatprep.subr.mxu0 0.0
    %1547 = vmatpush1.msra.mxu0 0.0
    %1548 = vmatprep.subr.mxu0 0.0
    %1549 = vmatpush1.msra.mxu0 0.0
    %1550 = vmatprep.subr.mxu0 0.0
    %1551 = vmatpush1.msra.mxu0 0.0
    %1552 = vmatprep.subr.mxu0 0.0
    %1553 = vmatpush1.msra.mxu0 0.0
    %1554 = vmatprep.subr.mxu0 0.0
    %1555 = vmatpush1.msra.mxu0 0.0
    %1556 = vmatprep.subr.mxu0 0.0
    %1557 = vmatpush1.msra.mxu0 0.0
    %1558 = vmatprep.mubr.f32.mxu0 %v1489
    %1559 = vmatmul.mubr.f32.gmra.mrb[0].mxu0 %v1464
    %v1560 = vpop.f32.mrb[0].mxu0
    %v1561 = vadd.f32 0.0, %v1560
    %v1562 = vpop.f32.mrb[0].mxu0
    %1563 = vmatprep.mubr.f32.mxu0 %v1492
    %1564 = vmatmul.mubr.f32.gmra.mrb[0].mxu0 %v1466
    %v1565 = vpop.f32.mrb[0].mxu0
    %v1566 = vadd.f32 0.0, %v1565
    %v1567 = vpop.f32.mrb[0].mxu0
    %1568 = vdwg.mxu0
    %v1569 = vld [vmem:[#allocation18] sm:$0xff]
    %v1570 = vld [vmem:[#allocation18 + $0x8] sm:$0xff]
    %v1571 = vld [vmem:[#allocation18 + $0x10] sm:$0xff]
    %v1572 = vld [vmem:[#allocation18 + $0x18] sm:$0xff]
    %v1573 = vld [vmem:[#allocation18 + $0x20] sm:$0xff]
    %v1574 = vld [vmem:[#allocation18 + $0x28] sm:$0xff]
    %v1575 = vld [vmem:[#allocation18 + $0x30] sm:$0xff]
    %v1576 = vld [vmem:[#allocation18 + $0x38] sm:$0xff]
    %v1577 = vld [vmem:[#allocation18 + $0x40] sm:$0xff]
    %v1578 = vld [vmem:[#allocation18 + $0x48] sm:$0xff]
    %v1579 = vld [vmem:[#allocation18 + $0x50] sm:$0xff]
    %v1580 = vld [vmem:[#allocation18 + $0x58] sm:$0xff]
    %v1581 = vld [vmem:[#allocation18 + $0x60] sm:$0xff]
    %v1582 = vld [vmem:[#allocation18 + $0x68] sm:$0xff]
    %v1583 = vld [vmem:[#allocation18 + $0x70] sm:$0xff]
    %v1584 = vld [vmem:[#allocation18 + $0x78] sm:$0xff]
    %v1585 = vld [vmem:[#allocation18 + $0x80] sm:$0xff]
    %v1586 = vld [vmem:[#allocation18 + $0x88] sm:$0xff]
    %v1587 = vld [vmem:[#allocation18 + $0x90] sm:$0xff]
    %v1588 = vld [vmem:[#allocation18 + $0x98] sm:$0xff]
    %1589 = vmatprep.subr.mxu0 0.0
    %1590 = vmatpush1.msra.mxu0 %v1569
    %1591 = vmatprep.subr.mxu0 0.0
    %1592 = vmatpush1.msra.mxu0 %v1570
    %1593 = vmatprep.subr.mxu0 0.0
    %1594 = vmatpush1.msra.mxu0 %v1571
    %1595 = vmatprep.subr.mxu0 0.0
    %1596 = vmatpush1.msra.mxu0 %v1572
    %1597 = vmatprep.subr.mxu0 0.0
    %1598 = vmatpush1.msra.mxu0 %v1573
    %1599 = vmatprep.subr.mxu0 0.0
    %1600 = vmatpush1.msra.mxu0 %v1574
    %1601 = vmatprep.subr.mxu0 0.0
    %1602 = vmatpush1.msra.mxu0 %v1575
    %1603 = vmatprep.subr.mxu0 0.0
    %1604 = vmatpush1.msra.mxu0 %v1576
    %1605 = vmatprep.subr.mxu0 0.0
    %1606 = vmatpush1.msra.mxu0 %v1577
    %1607 = vmatprep.subr.mxu0 0.0
    %1608 = vmatpush1.msra.mxu0 %v1578
    %1609 = vmatprep.subr.mxu0 0.0
    %1610 = vmatpush1.msra.mxu0 %v1579
    %1611 = vmatprep.subr.mxu0 0.0
    %1612 = vmatpush1.msra.mxu0 %v1580
    %1613 = vmatprep.subr.mxu0 0.0
    %1614 = vmatpush1.msra.mxu0 %v1581
    %1615 = vmatprep.subr.mxu0 0.0
    %1616 = vmatpush1.msra.mxu0 %v1582
    %1617 = vmatprep.subr.mxu0 0.0
    %1618 = vmatpush1.msra.mxu0 %v1583
    %1619 = vmatprep.subr.mxu0 0.0
    %1620 = vmatpush1.msra.mxu0 %v1584
    %1621 = vmatprep.subr.mxu0 0.0
    %1622 = vmatpush1.msra.mxu0 %v1585
    %1623 = vmatprep.subr.mxu0 0.0
    %1624 = vmatpush1.msra.mxu0 %v1586
    %1625 = vmatprep.subr.mxu0 0.0
    %1626 = vmatpush1.msra.mxu0 %v1587
    %1627 = vmatprep.subr.mxu0 0.0
    %1628 = vmatpush1.msra.mxu0 %v1588
    %1629 = vmatprep.subr.mxu0 0.0
    %1630 = vmatpush1.msra.mxu0 0.0
    %1631 = vmatprep.subr.mxu0 0.0
    %1632 = vmatpush1.msra.mxu0 0.0
    %1633 = vmatprep.subr.mxu0 0.0
    %1634 = vmatpush1.msra.mxu0 0.0
    %1635 = vmatprep.subr.mxu0 0.0
    %1636 = vmatpush1.msra.mxu0 0.0
    %1637 = vmatprep.subr.mxu0 0.0
    %1638 = vmatpush1.msra.mxu0 0.0
    %1639 = vmatprep.subr.mxu0 0.0
    %1640 = vmatpush1.msra.mxu0 0.0
    %1641 = vmatprep.subr.mxu0 0.0
    %1642 = vmatpush1.msra.mxu0 0.0
    %1643 = vmatprep.subr.mxu0 0.0
    %1644 = vmatpush1.msra.mxu0 0.0
    %1645 = vmatprep.subr.mxu0 0.0
    %1646 = vmatpush1.msra.mxu0 0.0
    %1647 = vmatprep.subr.mxu0 0.0
    %1648 = vmatpush1.msra.mxu0 0.0
    %1649 = vmatprep.subr.mxu0 0.0
    %1650 = vmatpush1.msra.mxu0 0.0
    %1651 = vmatprep.subr.mxu0 0.0
    %1652 = vmatpush1.msra.mxu0 0.0
    %1653 = vmatprep.mubr.f32.mxu0 %v1489
    %1654 = vmatmul.mubr.f32.gmra.mrb[0].mxu0 %v1464
    %v1655 = vpop.f32.mrb[0].mxu0
    %v1656 = vadd.f32 0.0, %v1655
    %v1657 = vpop.f32.mrb[0].mxu0
    %1658 = vmatprep.mubr.f32.mxu0 %v1492
    %1659 = vmatmul.mubr.f32.gmra.mrb[0].mxu0 %v1466
    %v1660 = vpop.f32.mrb[0].mxu0
    %v1661 = vadd.f32 0.0, %v1660
    %v1662 = vpop.f32.mrb[0].mxu0
    %1663 = vdwg.mxu0
    %v1664 = vmax.f32 %v1561, %v1656
    %v1665 = vmax.f32 %v1566, %v1661
    %1666 = vst.msk [vmem:[#allocation3] sm:$0xff] %vm973, %v1664
    %1667 = vst.msk [vmem:[#allocation3 + $0x8] sm:$0xff] %vm973, %v1665
    %v1668 = vld [vmem:[#allocation3] ss:$8 sm:$0x3]
    %s1669 = scalar_lea.vmem [#allocation3], 1
    %v1670 = vld [vmem:[%s1669] ss:$8 sm:$0x3]
    %s1671 = scalar_lea.vmem [#allocation3], 2
    %v1672 = vld [vmem:[%s1671] ss:$8 sm:$0x3]
    %s1673 = scalar_lea.vmem [#allocation3], 3
    %v1674 = vld [vmem:[%s1673] ss:$8 sm:$0x3]
    %s1675 = scalar_lea.vmem [#allocation3], 4
    %v1676 = vld [vmem:[%s1675] ss:$8 sm:$0x3]
    %1678 = vrot.lane.b32.xlu0 %v1670, 80
    %v1679 = vpop.permute.xlu0 %1678
    %1682 = vrot.lane.b32.xlu0 %v1672, 32
    %v1683 = vpop.permute.xlu0 %1682
    %1686 = vrot.lane.b32.xlu0 %v1674, 112
    %v1687 = vpop.permute.xlu0 %1686
    %1690 = vrot.lane.b32.xlu0 %v1676, 64
    %v1691 = vpop.permute.xlu0 %1690
    %v1693 = vsel %vm973, %v1668, %v1679
    %v1694 = vsel %vm331, %v1679, %v1683
    %vm1695 = vcmask 916480
    %v1696 = vsel %vm1695, %v1694, %v1687
    %v1697 = vsel %vm336, %v1687, %v1691
    %v1698 = vld [vmem:[#allocation19] sm:$0xff]
    %v1699 = vld [vmem:[#allocation19 + $0x8] sm:$0xff]
    %v1700 = vld [vmem:[#allocation19 + $0x10] sm:$0xff]
    %v1701 = vld [vmem:[#allocation19 + $0x18] sm:$0xff]
    %v1702 = vld [vmem:[#allocation19 + $0x20] sm:$0xff]
    %v1703 = vld [vmem:[#allocation19 + $0x28] sm:$0xff]
    %v1704 = vld [vmem:[#allocation19 + $0x30] sm:$0xff]
    %v1705 = vld [vmem:[#allocation19 + $0x38] sm:$0xff]
    %v1706 = vld [vmem:[#allocation19 + $0x40] sm:$0xff]
    %v1707 = vld [vmem:[#allocation19 + $0x48] sm:$0xff]
    %v1708 = vld [vmem:[#allocation19 + $0x50] sm:$0xff]
    %v1709 = vld [vmem:[#allocation19 + $0x58] sm:$0xff]
    %v1710 = vld [vmem:[#allocation19 + $0x60] sm:$0xff]
    %v1711 = vld [vmem:[#allocation19 + $0x68] sm:$0xff]
    %v1712 = vld [vmem:[#allocation19 + $0x70] sm:$0xff]
    %v1713 = vld [vmem:[#allocation19 + $0x78] sm:$0xff]
    %v1714 = vld [vmem:[#allocation19 + $0x80] sm:$0xff]
    %v1715 = vld [vmem:[#allocation19 + $0x88] sm:$0xff]
    %v1716 = vld [vmem:[#allocation19 + $0x90] sm:$0xff]
    %v1717 = vld [vmem:[#allocation19 + $0x98] sm:$0xff]
    %v1718 = vld [vmem:[#allocation19 + $0xa0] sm:$0xff]
    %v1719 = vld [vmem:[#allocation19 + $0xa8] sm:$0xff]
    %v1720 = vld [vmem:[#allocation19 + $0xb0] sm:$0xff]
    %v1721 = vld [vmem:[#allocation19 + $0xb8] sm:$0xff]
    %v1722 = vld [vmem:[#allocation19 + $0xc0] sm:$0xff]
    %v1723 = vld [vmem:[#allocation19 + $0xc8] sm:$0xff]
    %v1724 = vld [vmem:[#allocation19 + $0xd0] sm:$0xff]
    %v1725 = vld [vmem:[#allocation19 + $0xd8] sm:$0xff]
    %v1726 = vld [vmem:[#allocation19 + $0xe0] sm:$0xff]
    %v1727 = vld [vmem:[#allocation19 + $0xe8] sm:$0xff]
    %v1728 = vld [vmem:[#allocation19 + $0xf0] sm:$0xff]
    %v1729 = vld [vmem:[#allocation19 + $0xf8] sm:$0xff]
    %v1730 = vld [vmem:[#allocation19 + $0x100] sm:$0xff]
    %v1731 = vld [vmem:[#allocation19 + $0x108] sm:$0xff]
    %v1732 = vld [vmem:[#allocation19 + $0x110] sm:$0xff]
    %v1733 = vld [vmem:[#allocation19 + $0x118] sm:$0xff]
    %v1734 = vld [vmem:[#allocation19 + $0x120] sm:$0xff]
    %v1735 = vld [vmem:[#allocation19 + $0x128] sm:$0xff]
    %v1736 = vld [vmem:[#allocation19 + $0x130] sm:$0xff]
    %v1737 = vld [vmem:[#allocation19 + $0x138] sm:$0xff]
    %v1738 = vld [vmem:[#allocation19 + $0x140] sm:$0xff]
    %v1739 = vld [vmem:[#allocation19 + $0x148] sm:$0xff]
    %v1740 = vld [vmem:[#allocation19 + $0x150] sm:$0xff]
    %v1741 = vld [vmem:[#allocation19 + $0x158] sm:$0xff]
    %v1742 = vld [vmem:[#allocation19 + $0x160] sm:$0xff]
    %v1743 = vld [vmem:[#allocation19 + $0x168] sm:$0xff]
    %v1744 = vld [vmem:[#allocation19 + $0x170] sm:$0xff]
    %v1745 = vld [vmem:[#allocation19 + $0x178] sm:$0xff]
    %v1746 = vld [vmem:[#allocation19 + $0x180] sm:$0xff]
    %v1747 = vld [vmem:[#allocation19 + $0x188] sm:$0xff]
    %v1748 = vld [vmem:[#allocation21] sm:$0x1]
    %v1750 = vlaneseq
    %v1751 = vshrl.u32 %v1750, 7
    %v1752 = vsub.s32 0, %v1751
    %v1753 = vrot.slane %v1748, %v1752
    %vm1755 = vcmask 130048
    %v1756 = vsel %vm1755, %v1691, 0
    %1758 = vmatprep.subr.mxu0 0.0
    %1759 = vmatpush1.msra.mxu0 %v1698
    %1760 = vmatprep.subr.mxu0 0.0
    %1761 = vmatpush1.msra.mxu0 %v1699
    %1762 = vmatprep.subr.mxu0 0.0
    %1763 = vmatpush1.msra.mxu0 %v1700
    %1764 = vmatprep.subr.mxu0 0.0
    %1765 = vmatpush1.msra.mxu0 %v1701
    %1766 = vmatprep.subr.mxu0 0.0
    %1767 = vmatpush1.msra.mxu0 %v1702
    %1768 = vmatprep.subr.mxu0 0.0
    %1769 = vmatpush1.msra.mxu0 %v1703
    %1770 = vmatprep.subr.mxu0 0.0
    %1771 = vmatpush1.msra.mxu0 %v1704
    %1772 = vmatprep.subr.mxu0 0.0
    %1773 = vmatpush1.msra.mxu0 %v1705
    %1774 = vmatprep.subr.mxu0 0.0
    %1775 = vmatpush1.msra.mxu0 %v1706
    %1776 = vmatprep.subr.mxu0 0.0
    %1777 = vmatpush1.msra.mxu0 %v1707
    %1778 = vmatprep.subr.mxu0 0.0
    %1779 = vmatpush1.msra.mxu0 %v1708
    %1780 = vmatprep.subr.mxu0 0.0
    %1781 = vmatpush1.msra.mxu0 %v1709
    %1782 = vmatprep.subr.mxu0 0.0
    %1783 = vmatpush1.msra.mxu0 %v1710
    %1784 = vmatprep.subr.mxu0 0.0
    %1785 = vmatpush1.msra.mxu0 %v1711
    %1786 = vmatprep.subr.mxu0 0.0
    %1787 = vmatpush1.msra.mxu0 %v1712
    %1788 = vmatprep.subr.mxu0 0.0
    %1789 = vmatpush1.msra.mxu0 %v1713
    %1790 = vmatprep.subr.mxu0 0.0
    %1791 = vmatpush1.msra.mxu0 %v1714
    %1792 = vmatprep.subr.mxu0 0.0
    %1793 = vmatpush1.msra.mxu0 %v1715
    %1794 = vmatprep.subr.mxu0 0.0
    %1795 = vmatpush1.msra.mxu0 %v1716
    %1796 = vmatprep.subr.mxu0 0.0
    %1797 = vmatpush1.msra.mxu0 %v1717
    %1798 = vmatprep.subr.mxu0 0.0
    %1799 = vmatpush1.msra.mxu0 %v1718
    %1800 = vmatprep.subr.mxu0 0.0
    %1801 = vmatpush1.msra.mxu0 %v1719
    %1802 = vmatprep.subr.mxu0 0.0
    %1803 = vmatpush1.msra.mxu0 %v1720
    %1804 = vmatprep.subr.mxu0 0.0
    %1805 = vmatpush1.msra.mxu0 %v1721
    %1806 = vmatprep.subr.mxu0 0.0
    %1807 = vmatpush1.msra.mxu0 %v1722
    %1808 = vmatprep.subr.mxu0 0.0
    %1809 = vmatpush1.msra.mxu0 %v1723
    %1810 = vmatprep.subr.mxu0 0.0
    %1811 = vmatpush1.msra.mxu0 %v1724
    %1812 = vmatprep.subr.mxu0 0.0
    %1813 = vmatpush1.msra.mxu0 %v1725
    %1814 = vmatprep.subr.mxu0 0.0
    %1815 = vmatpush1.msra.mxu0 %v1726
    %1816 = vmatprep.subr.mxu0 0.0
    %1817 = vmatpush1.msra.mxu0 %v1727
    %1818 = vmatprep.subr.mxu0 0.0
    %1819 = vmatpush1.msra.mxu0 %v1728
    %1820 = vmatprep.subr.mxu0 0.0
    %1821 = vmatpush1.msra.mxu0 %v1729
    %1822 = vmatprep.mubr.f32.mxu0 %v1696
    %1823 = vmatmul.mubr.f32.gmra.mrb[0].mxu0 %v1693
    %v1824 = vpop.f32.mrb[0].mxu0
    %v1825 = vadd.f32 %v1753, %v1824
    %v1826 = vpop.f32.mrb[0].mxu0
    %1827 = vdwg.mxu0
    %1828 = vmatprep.subr.mxu0 0.0
    %1829 = vmatpush1.msra.mxu0 %v1730
    %1830 = vmatprep.subr.mxu0 0.0
    %1831 = vmatpush1.msra.mxu0 %v1731
    %1832 = vmatprep.subr.mxu0 0.0
    %1833 = vmatpush1.msra.mxu0 %v1732
    %1834 = vmatprep.subr.mxu0 0.0
    %1835 = vmatpush1.msra.mxu0 %v1733
    %1836 = vmatprep.subr.mxu0 0.0
    %1837 = vmatpush1.msra.mxu0 %v1734
    %1838 = vmatprep.subr.mxu0 0.0
    %1839 = vmatpush1.msra.mxu0 %v1735
    %1840 = vmatprep.subr.mxu0 0.0
    %1841 = vmatpush1.msra.mxu0 %v1736
    %1842 = vmatprep.subr.mxu0 0.0
    %1843 = vmatpush1.msra.mxu0 %v1737
    %1844 = vmatprep.subr.mxu0 0.0
    %1845 = vmatpush1.msra.mxu0 %v1738
    %1846 = vmatprep.subr.mxu0 0.0
    %1847 = vmatpush1.msra.mxu0 %v1739
    %1848 = vmatprep.subr.mxu0 0.0
    %1849 = vmatpush1.msra.mxu0 %v1740
    %1850 = vmatprep.subr.mxu0 0.0
    %1851 = vmatpush1.msra.mxu0 %v1741
    %1852 = vmatprep.subr.mxu0 0.0
    %1853 = vmatpush1.msra.mxu0 %v1742
    %1854 = vmatprep.subr.mxu0 0.0
    %1855 = vmatpush1.msra.mxu0 %v1743
    %1856 = vmatprep.subr.mxu0 0.0
    %1857 = vmatpush1.msra.mxu0 %v1744
    %1858 = vmatprep.subr.mxu0 0.0
    %1859 = vmatpush1.msra.mxu0 %v1745
    %1860 = vmatprep.subr.mxu0 0.0
    %1861 = vmatpush1.msra.mxu0 %v1746
    %1862 = vmatprep.subr.mxu0 0.0
    %1863 = vmatpush1.msra.mxu0 %v1747
    %1864 = vmatprep.subr.mxu0 0.0
    %1865 = vmatpush1.msra.mxu0 0.0
    %1866 = vmatprep.subr.mxu0 0.0
    %1867 = vmatpush1.msra.mxu0 0.0
    %1868 = vmatprep.subr.mxu0 0.0
    %1869 = vmatpush1.msra.mxu0 0.0
    %1870 = vmatprep.subr.mxu0 0.0
    %1871 = vmatpush1.msra.mxu0 0.0
    %1872 = vmatprep.subr.mxu0 0.0
    %1873 = vmatpush1.msra.mxu0 0.0
    %1874 = vmatprep.subr.mxu0 0.0
    %1875 = vmatpush1.msra.mxu0 0.0
    %1876 = vmatprep.subr.mxu0 0.0
    %1877 = vmatpush1.msra.mxu0 0.0
    %1878 = vmatprep.subr.mxu0 0.0
    %1879 = vmatpush1.msra.mxu0 0.0
    %1880 = vmatprep.subr.mxu0 0.0
    %1881 = vmatpush1.msra.mxu0 0.0
    %1882 = vmatprep.subr.mxu0 0.0
    %1883 = vmatpush1.msra.mxu0 0.0
    %1884 = vmatprep.subr.mxu0 0.0
    %1885 = vmatpush1.msra.mxu0 0.0
    %1886 = vmatprep.subr.mxu0 0.0
    %1887 = vmatpush1.msra.mxu0 0.0
    %1888 = vmatprep.subr.mxu0 0.0
    %1889 = vmatpush1.msra.mxu0 0.0
    %1890 = vmatprep.subr.mxu0 0.0
    %1891 = vmatpush1.msra.mxu0 0.0
    %1892 = vmatprep.mubr.f32.mxu0 %v1756
    %1893 = vmatmul.mubr.f32.gmra.mrb[0].mxu0 %v1697
    %v1894 = vpop.f32.mrb[0].mxu0
    %v1895 = vadd.f32 %v1825, %v1894
    %v1896 = vpop.f32.mrb[0].mxu0
    %1897 = vdwg.mxu0
    %v1898 = vmax.f32 %v1895, 0.0
    %v1899 = vld [vmem:[#allocation22] sm:$0xff]
    %v1900 = vld [vmem:[#allocation22 + $0x8] sm:$0xff]
    %v1901 = vld [vmem:[#allocation22 + $0x10] sm:$0xff]
    %v1902 = vld [vmem:[#allocation22 + $0x18] sm:$0xff]
    %v1903 = vld [vmem:[#allocation22 + $0x20] sm:$0xff]
    %v1904 = vld [vmem:[#allocation22 + $0x28] sm:$0xff]
    %v1905 = vld [vmem:[#allocation22 + $0x30] sm:$0xff]
    %v1906 = vld [vmem:[#allocation22 + $0x38] sm:$0xff]
    %v1907 = vld [vmem:[#allocation22 + $0x40] sm:$0xff]
    %v1908 = vld [vmem:[#allocation22 + $0x48] sm:$0xff]
    %v1909 = vld [vmem:[#allocation22 + $0x50] sm:$0xff]
    %v1910 = vld [vmem:[#allocation22 + $0x58] sm:$0xff]
    %v1911 = vld [vmem:[#allocation22 + $0x60] sm:$0xff]
    %v1912 = vld [vmem:[#allocation22 + $0x68] sm:$0xff]
    %v1913 = vld [vmem:[#allocation22 + $0x70] sm:$0xff]
    %v1914 = vld [vmem:[#allocation22 + $0x78] sm:$0xff]
    %v1915 = vld [vmem:[#allocation24] sm:$0x1]
    %v1917 = vlaneseq
    %v1918 = vshrl.u32 %v1917, 7
    %v1919 = vsub.s32 0, %v1918
    %v1920 = vrot.slane %v1915, %v1919
    %1922 = vmatprep.subr.mxu0 0.0
    %1923 = vmatpush1.msra.mxu0 %v1899
    %1924 = vmatprep.subr.mxu0 0.0
    %1925 = vmatpush1.msra.mxu0 %v1900
    %1926 = vmatprep.subr.mxu0 0.0
    %1927 = vmatpush1.msra.mxu0 %v1901
    %1928 = vmatprep.subr.mxu0 0.0
    %1929 = vmatpush1.msra.mxu0 %v1902
    %1930 = vmatprep.subr.mxu0 0.0
    %1931 = vmatpush1.msra.mxu0 %v1903
    %1932 = vmatprep.subr.mxu0 0.0
    %1933 = vmatpush1.msra.mxu0 %v1904
    %1934 = vmatprep.subr.mxu0 0.0
    %1935 = vmatpush1.msra.mxu0 %v1905
    %1936 = vmatprep.subr.mxu0 0.0
    %1937 = vmatpush1.msra.mxu0 %v1906
    %1938 = vmatprep.subr.mxu0 0.0
    %1939 = vmatpush1.msra.mxu0 %v1907
    %1940 = vmatprep.subr.mxu0 0.0
    %1941 = vmatpush1.msra.mxu0 %v1908
    %1942 = vmatprep.subr.mxu0 0.0
    %1943 = vmatpush1.msra.mxu0 %v1909
    %1944 = vmatprep.subr.mxu0 0.0
    %1945 = vmatpush1.msra.mxu0 %v1910
    %1946 = vmatprep.subr.mxu0 0.0
    %1947 = vmatpush1.msra.mxu0 %v1911
    %1948 = vmatprep.subr.mxu0 0.0
    %1949 = vmatpush1.msra.mxu0 %v1912
    %1950 = vmatprep.subr.mxu0 0.0
    %1951 = vmatpush1.msra.mxu0 %v1913
    %1952 = vmatprep.subr.mxu0 0.0
    %1953 = vmatpush1.msra.mxu0 %v1914
    %1954 = vmatprep.subr.mxu0 0.0
    %1955 = vmatpush1.msra.mxu0 0.0
    %1956 = vmatprep.subr.mxu0 0.0
    %1957 = vmatpush1.msra.mxu0 0.0
    %1958 = vmatprep.subr.mxu0 0.0
    %1959 = vmatpush1.msra.mxu0 0.0
    %1960 = vmatprep.subr.mxu0 0.0
    %1961 = vmatpush1.msra.mxu0 0.0
    %1962 = vmatprep.subr.mxu0 0.0
    %1963 = vmatpush1.msra.mxu0 0.0
    %1964 = vmatprep.subr.mxu0 0.0
    %1965 = vmatpush1.msra.mxu0 0.0
    %1966 = vmatprep.subr.mxu0 0.0
    %1967 = vmatpush1.msra.mxu0 0.0
    %1968 = vmatprep.subr.mxu0 0.0
    %1969 = vmatpush1.msra.mxu0 0.0
    %1970 = vmatprep.subr.mxu0 0.0
    %1971 = vmatpush1.msra.mxu0 0.0
    %1972 = vmatprep.subr.mxu0 0.0
    %1973 = vmatpush1.msra.mxu0 0.0
    %1974 = vmatprep.subr.mxu0 0.0
    %1975 = vmatpush1.msra.mxu0 0.0
    %1976 = vmatprep.subr.mxu0 0.0
    %1977 = vmatpush1.msra.mxu0 0.0
    %1978 = vmatprep.subr.mxu0 0.0
    %1979 = vmatpush1.msra.mxu0 0.0
    %1980 = vmatprep.subr.mxu0 0.0
    %1981 = vmatpush1.msra.mxu0 0.0
    %1982 = vmatprep.subr.mxu0 0.0
    %1983 = vmatpush1.msra.mxu0 0.0
    %1984 = vmatprep.subr.mxu0 0.0
    %1985 = vmatpush1.msra.mxu0 0.0
    %1986 = vmatprep.mubr.f32.mxu0 0.0
    %1987 = vmatmul.mubr.f32.gmra.mrb[0].mxu0 %v1898
    %v1988 = vpop.f32.mrb[0].mxu0
    %v1989 = vadd.f32 %v1920, %v1988
    %v1990 = vpop.f32.mrb[0].mxu0
    %1991 = vdwg.mxu0
    %v1992 = vmax.f32 %v1989, 0.0
    %v1993 = vld [vmem:[#allocation25] sm:$0xff]
    %v1994 = vld [vmem:[#allocation25 + $0x8] sm:$0xff]
    %v1995 = vld [vmem:[#allocation25 + $0x10] sm:$0xff]
    %v1996 = vld [vmem:[#allocation25 + $0x18] sm:$0xff]
    %v1997 = vld [vmem:[#allocation25 + $0x20] sm:$0xff]
    %v1998 = vld [vmem:[#allocation25 + $0x28] sm:$0xff]
    %v1999 = vld [vmem:[#allocation25 + $0x30] sm:$0xff]
    %v2000 = vld [vmem:[#allocation25 + $0x38] sm:$0xff]
    %v2001 = vld [vmem:[#allocation25 + $0x40] sm:$0xff]
    %v2002 = vld [vmem:[#allocation25 + $0x48] sm:$0xff]
    %v2003 = vld [vmem:[#allocation25 + $0x50] sm:$0xff]
    %v2004 = vld [vmem:[#allocation25 + $0x58] sm:$0xff]
    %v2005 = vld [vmem:[#allocation25 + $0x60] sm:$0xff]
    %v2006 = vld [vmem:[#allocation25 + $0x68] sm:$0xff]
    %v2007 = vld [vmem:[#allocation25 + $0x70] sm:$0xff]
    %v2008 = vld [vmem:[#allocation25 + $0x78] sm:$0xff]
    %v2009 = vld [vmem:[#allocation27] sm:$0x1]
    %v2011 = vlaneseq
    %v2012 = vshrl.u32 %v2011, 7
    %v2013 = vsub.s32 0, %v2012
    %v2014 = vrot.slane %v2009, %v2013
    %2016 = vmatprep.subr.mxu0 0.0
    %2017 = vmatpush1.msra.mxu0 %v1993
    %2018 = vmatprep.subr.mxu0 0.0
    %2019 = vmatpush1.msra.mxu0 %v1994
    %2020 = vmatprep.subr.mxu0 0.0
    %2021 = vmatpush1.msra.mxu0 %v1995
    %2022 = vmatprep.subr.mxu0 0.0
    %2023 = vmatpush1.msra.mxu0 %v1996
    %2024 = vmatprep.subr.mxu0 0.0
    %2025 = vmatpush1.msra.mxu0 %v1997
    %2026 = vmatprep.subr.mxu0 0.0
    %2027 = vmatpush1.msra.mxu0 %v1998
    %2028 = vmatprep.subr.mxu0 0.0
    %2029 = vmatpush1.msra.mxu0 %v1999
    %2030 = vmatprep.subr.mxu0 0.0
    %2031 = vmatpush1.msra.mxu0 %v2000
    %2032 = vmatprep.subr.mxu0 0.0
    %2033 = vmatpush1.msra.mxu0 %v2001
    %2034 = vmatprep.subr.mxu0 0.0
    %2035 = vmatpush1.msra.mxu0 %v2002
    %2036 = vmatprep.subr.mxu0 0.0
    %2037 = vmatpush1.msra.mxu0 %v2003
    %2038 = vmatprep.subr.mxu0 0.0
    %2039 = vmatpush1.msra.mxu0 %v2004
    %2040 = vmatprep.subr.mxu0 0.0
    %2041 = vmatpush1.msra.mxu0 %v2005
    %2042 = vmatprep.subr.mxu0 0.0
    %2043 = vmatpush1.msra.mxu0 %v2006
    %2044 = vmatprep.subr.mxu0 0.0
    %2045 = vmatpush1.msra.mxu0 %v2007
    %2046 = vmatprep.subr.mxu0 0.0
    %2047 = vmatpush1.msra.mxu0 %v2008
    %2048 = vmatprep.subr.mxu0 0.0
    %2049 = vmatpush1.msra.mxu0 0.0
    %2050 = vmatprep.subr.mxu0 0.0
    %2051 = vmatpush1.msra.mxu0 0.0
    %2052 = vmatprep.subr.mxu0 0.0
    %2053 = vmatpush1.msra.mxu0 0.0
    %2054 = vmatprep.subr.mxu0 0.0
    %2055 = vmatpush1.msra.mxu0 0.0
    %2056 = vmatprep.subr.mxu0 0.0
    %2057 = vmatpush1.msra.mxu0 0.0
    %2058 = vmatprep.subr.mxu0 0.0
    %2059 = vmatpush1.msra.mxu0 0.0
    %2060 = vmatprep.subr.mxu0 0.0
    %2061 = vmatpush1.msra.mxu0 0.0
    %2062 = vmatprep.subr.mxu0 0.0
    %2063 = vmatpush1.msra.mxu0 0.0
    %2064 = vmatprep.subr.mxu0 0.0
    %2065 = vmatpush1.msra.mxu0 0.0
    %2066 = vmatprep.subr.mxu0 0.0
    %2067 = vmatpush1.msra.mxu0 0.0
    %2068 = vmatprep.subr.mxu0 0.0
    %2069 = vmatpush1.msra.mxu0 0.0
    %2070 = vmatprep.subr.mxu0 0.0
    %2071 = vmatpush1.msra.mxu0 0.0
    %2072 = vmatprep.subr.mxu0 0.0
    %2073 = vmatpush1.msra.mxu0 0.0
    %2074 = vmatprep.subr.mxu0 0.0
    %2075 = vmatpush1.msra.mxu0 0.0
    %2076 = vmatprep.subr.mxu0 0.0
    %2077 = vmatpush1.msra.mxu0 0.0
    %2078 = vmatprep.subr.mxu0 0.0
    %2079 = vmatpush1.msra.mxu0 0.0
    %2080 = vmatprep.mubr.f32.mxu0 0.0
    %2081 = vmatmul.mubr.f32.gmra.mrb[0].mxu0 %v1992
    %v2082 = vpop.f32.mrb[0].mxu0
    %v2083 = vadd.f32 %v2014, %v2082
    %v2084 = vpop.f32.mrb[0].mxu0
    %2085 = vdwg.mxu0
    %2086 = vst [vmem:[#allocation28] sm:$0x3] %v2083
    // Predicated region
    $region122: #{lenet_forward.1} parent=1 // pred_check
      _
    $region123: #{lenet_forward.1} parent=1 // pred_check_branch
      %2088 = sbr.rel (0) target = $region125
    $region124: #{lenet_forward.1} parent=1 // pred_region
      %s2090 = ssub.s32 32, 32
      %2091 = vsyncadd [#allocation6], %s2090
      %s2093 = sshll.u32 [#allocation28], 4
      %s2094 = int_to_ptr.vmem [resolvable:$true] %s2093
      %2096 = dma.vmem_to_hbm [thread:$0]  %s2094, 32, %s15, [#allocation6]
    $region125: #{lenet_forward.1} parent=1 // pred_fallthru
      _
    // Predicated region
    $region126: #{lenet_forward.1} parent=1 // pred_check
      _
    $region127: #{lenet_forward.1} parent=1 // pred_check_branch
      %2098 = sbr.rel (0) target = $region129
    $region128: #{lenet_forward.1} parent=1 // pred_region
      %2099 = dma.done [#allocation6], 32
    $region129: #{lenet_forward.1} parent=1 // pred_fallthru
      _
    %2100 = vsyncpa [#allocation5], 1
    %2101 = vsyncpa [#allocation8], 1
    %2102 = vsyncpa [#allocation11], 1
    %2103 = vsyncpa [#allocation14], 1
    %2104 = vsyncpa [#allocation17], 1
    %2105 = vsyncpa [#allocation20], 1
    %2106 = vsyncpa [#allocation23], 1
    %2107 = vsyncpa [#allocation26], 1
    %2108 = vsyncpa [#allocation6], 1

</llo_original>
